<compile_context>
chip_gen: v7x
topology: tpu7x:2x2x1
jax: 0.10.0
libtpu: 0.0.40
codegen_flags: <defaults>
</compile_context>

<pallas_src>
import functools

import jax
import jax.numpy as jnp
from jax import lax
from jax.experimental import pallas as pl
from jax.experimental.pallas import tpu as pltpu


def furthest_point_sample(xyz, npoint):
    """Deterministic FPS (starts at index 0). xyz: [B,N,3] -> [B,npoint] int32.

    The pointnet2 CUDA op is inherently sequential / data dependent, so it is
    kept as plain JAX glue outside the Pallas kernel.
    """
    B, N, _ = xyz.shape

    def body(i, state):
        idxs, dist, farthest = state
        idxs = idxs.at[:, i].set(farthest)
        centroid = jnp.take_along_axis(xyz, farthest[:, None, None], axis=1)  # [B,1,3]
        d = jnp.sum((xyz - centroid) ** 2, axis=-1)                           # [B,N]
        dist = jnp.minimum(dist, d)
        farthest = jnp.argmax(dist, axis=1).astype(jnp.int32)
        return idxs, dist, farthest

    init = (jnp.zeros((B, npoint), jnp.int32),
            jnp.full((B, N), 1e10, jnp.float32),
            jnp.zeros((B,), jnp.int32))
    idxs, _, _ = lax.fori_loop(0, npoint, body, init)
    return idxs


def _grouper_kernel(idx_ref, xyzt_ref, sq_ref, pxz_ref, alpha_ref, beta_ref,
                    newxyz_ref, out_ref, sel_ref, d_ref, *, G, K, N, C):
    """Per-batch-element kernel.

    idx_ref   : (1, G, 1) int32   FPS indices
    xyzt_ref  : (1, 3, N)         xyz transposed (lane-dense)
    sq_ref    : (1, 1, N)         |xyz|^2 per point (precomputed)
    pxz_ref   : (1, N, C+3)       [points | xyz] slab for all gathers
    alpha/beta: (1, C+3)          affine params
    newxyz_ref: (1, G, 3)
    out_ref   : (1, K, G, 2C+3)
    sel_ref   : (K*G, N) f32 VMEM scratch  (stacked kNN one-hots, k-major)
    d_ref     : (G, N)   f32 VMEM scratch  (running distance matrix)
    """
    Cadd = C + 3
    idx = idx_ref[0]            # [G, 1] int32
    xyz_t = xyzt_ref[0]         # [3, N]
    sq_all = sq_ref[0]          # [1, N]
    pxz = pxz_ref[0]            # [N, Cadd]
    alpha = alpha_ref[...]      # [1, Cadd]
    beta = beta_ref[...]        # [1, Cadd]

    iota = lax.broadcasted_iota(jnp.int32, (G, N), 1)

    # --- FPS-center gather via one-hot matmul (exact in f32 on the MXU). ---
    oh_fps = (iota == idx).astype(jnp.float32)                                # [G, N]
    new_feat = jnp.dot(oh_fps, pxz, preferred_element_type=jnp.float32)       # [G, Cadd]
    new_pts = new_feat[:, :C]                                                 # [G, C]
    new_xyz = new_feat[:, C:]                                                 # [G, 3]
    newxyz_ref[0] = new_xyz

    # --- Pairwise squared distances  |q|^2 - 2 q.p + |p|^2  ->  [G, N]. ---
    cross = jnp.dot(new_xyz, xyz_t, preferred_element_type=jnp.float32)       # [G, N]
    sq_new = jnp.sum(new_xyz * new_xyz, axis=1, keepdims=True)                # [G, 1]
    d_ref[...] = sq_new - 2.0 * cross + sq_all                                # [G, N]

    # --- kNN by iterative min-extraction (topk(largest=False, sorted=False)).
    # Only the one-hot rows are stacked here; the gather happens once after.
    def knn_body(k, carry):
        d = d_ref[...]
        minval = jnp.min(d, axis=1, keepdims=True)                            # [G, 1]
        sel_idx = jnp.min(jnp.where(d == minval, iota, N),
                          axis=1, keepdims=True)                              # [G, 1]
        hit = iota == sel_idx
        sel_ref[pl.ds(k * G, G), :] = hit.astype(jnp.float32)                 # k-major rows
        d_ref[...] = jnp.where(hit, jnp.float32(1e30), d)
        return carry

    lax.fori_loop(0, K, knn_body, 0, unroll=True)

    # --- One fused neighbor gather on the MXU:  [K*G, N] x [N, C+3]. ---
    feats = jnp.dot(sel_ref[...], pxz, preferred_element_type=jnp.float32)    # [K*G, Cadd]
    feats3 = feats.reshape(K, G, Cadd)                                        # [K, G, Cadd]

    # --- normalize == 'center': mean over the K neighbors per (group, chan).
    mean = jnp.sum(feats3, axis=0, keepdims=True) * (1.0 / K)                 # [1, G, Cadd]
    centered = feats3 - mean                                                  # [K, G, Cadd]

    # Global unbiased std over all K*G*(C+3) values (torch.std default).
    n_elems = float(K * G * Cadd)
    c2 = centered.reshape(K * G, Cadd)
    xbar = jnp.sum(c2, keepdims=True) * (1.0 / n_elems)                       # (1,1)
    var = jnp.sum((c2 - xbar) ** 2, keepdims=True) * (1.0 / (n_elems - 1.0))  # (1,1)
    inv = 1.0 / (jnp.sqrt(var) + 1e-5)                                        # (1,1)

    # Affine + center-feature concat, written as one full slab store.
    normed = alpha * (centered * inv) + beta                                  # [K, G, Cadd]
    center = jnp.broadcast_to(new_pts[None], (K, G, C))                       # [K, G, C]
    out_ref[0] = jnp.concatenate([normed, center], axis=-1)                   # [K, G, 2C+3]


def global_local_grouper(xyz, points, *, groups, kneighbors, alpha, beta):
    """use_xyz=True, normalize='center', use_attention=False."""
    B, N, _ = xyz.shape
    C = points.shape[-1]
    G, K = groups, kneighbors
    Cadd = C + 3
    Dout = Cadd + C

    # Glue: FPS indices (tiny), a single pre-concatenated gather slab, the
    # lane-dense xyz transpose and the precomputed |p|^2 row.
    fps_idx = furthest_point_sample(xyz, G)                        # [B, G] int32
    idx3 = fps_idx[:, :, None]                                     # [B, G, 1]
    pts_xyz = jnp.concatenate([points, xyz], axis=-1)              # [B, N, C+3]
    xyz_t = jnp.transpose(xyz, (0, 2, 1))                          # [B, 3, N]
    sq_all = jnp.sum(xyz * xyz, axis=-1)[:, None, :]               # [B, 1, N]

    kernel = functools.partial(_grouper_kernel, G=G, K=K, N=N, C=C)
    new_xyz, out = pl.pallas_call(
        kernel,
        out_shape=(jax.ShapeDtypeStruct((B, G, 3), jnp.float32),
                   jax.ShapeDtypeStruct((B, K, G, Dout), jnp.float32)),
        grid_spec=pltpu.PrefetchScalarGridSpec(
            num_scalar_prefetch=0,
            grid=(B,),
            in_specs=[
                pl.BlockSpec((1, G, 1), lambda b: (b, 0, 0)),      # fps idx
                pl.BlockSpec((1, 3, N), lambda b: (b, 0, 0)),      # xyz^T
                pl.BlockSpec((1, 1, N), lambda b: (b, 0, 0)),      # |xyz|^2
                pl.BlockSpec((1, N, Cadd), lambda b: (b, 0, 0)),   # [points|xyz]
                pl.BlockSpec((1, Cadd), lambda b: (0, 0)),         # alpha
                pl.BlockSpec((1, Cadd), lambda b: (0, 0)),         # beta
            ],
            out_specs=[
                pl.BlockSpec((1, G, 3), lambda b: (b, 0, 0)),
                pl.BlockSpec((1, K, G, Dout), lambda b: (b, 0, 0, 0)),
            ],
            scratch_shapes=[
                pltpu.VMEM((K * G, N), jnp.float32),   # stacked kNN one-hots
                pltpu.VMEM((G, N), jnp.float32),       # running distances
            ],
        ),
        compiler_params=pltpu.CompilerParams(
            dimension_semantics=("parallel",)),
    )(idx3, xyz_t, sq_all, pts_xyz, alpha, beta)

    # Kernel emits k-major [B, K, G, Dout]; module convention is [B, G, K, Dout].
    new_points = jnp.transpose(out, (0, 2, 1, 3))
    return new_xyz, new_points


if __name__ == "__main__":
    key = jax.random.PRNGKey(0)
    B, N, C = 2, 64, 16      # batch, points, feature channels
    G, K = 8, 8              # groups, kneighbors

    kx, kp = jax.random.split(key)
    xyz = jax.random.normal(kx, (B, N, 3), dtype=jnp.float32)
    points = jax.random.normal(kp, (B, N, C), dtype=jnp.float32)

    # Module __init__ (normalize='center', use_xyz=True):
    #   affine_alpha = ones([1,1,1,C+3]), affine_beta = zeros([1,1,1,C+3])
    alpha = jnp.ones((1, C + 3), dtype=jnp.float32)
    beta = jnp.zeros((1, C + 3), dtype=jnp.float32)

    @jax.jit
    def run(xyz_, points_, alpha_, beta_):
        return global_local_grouper(xyz_, points_, groups=G, kneighbors=K,
                                    alpha=alpha_, beta=beta_)

    new_xyz, new_points = run(xyz, points, alpha, beta)
    jax.block_until_ready((new_xyz, new_points))

    assert new_xyz.shape == (B, G, 3)
    assert new_points.shape == (B, G, K, 2 * C + 3)
    assert bool(jnp.all(jnp.isfinite(new_points)))
    assert bool(jnp.all(jnp.isfinite(new_xyz)))
    print("KERNEL_OK")
</pallas_src>

<mosaic_0001>
module attributes {stable_mosaic.version = 11 : i64} {
  func.func @_grouper_kernel(%arg0: i32, %arg1: memref<1x8x1xi32, #tpu.memory_space<vmem>>, %arg2: memref<1x3x64xf32, #tpu.memory_space<vmem>>, %arg3: memref<1x1x64xf32, #tpu.memory_space<vmem>>, %arg4: memref<1x64x19xf32, #tpu.memory_space<vmem>>, %arg5: memref<1x19xf32, #tpu.memory_space<vmem>>, %arg6: memref<1x19xf32, #tpu.memory_space<vmem>>, %arg7: memref<1x8x3xf32, #tpu.memory_space<vmem>>, %arg8: memref<1x8x8x35xf32, #tpu.memory_space<vmem>>, %arg9: memref<64x64xf32, #tpu.memory_space<vmem>>, %arg10: memref<8x64xf32, #tpu.memory_space<vmem>>) attributes {dimension_semantics = [#tpu.dimension_semantics<parallel>], iteration_bounds = array<i64: 2>, scalar_prefetch = 0 : i64, scratch_operands = 2 : i64, tpu.core_type = #tpu.core_type<tc>, window_params = [{transform_indices = @transform_0, window_bounds = array<i64: 1, 8, 1>}, {transform_indices = @transform_1, window_bounds = array<i64: 1, 3, 64>}, {transform_indices = @transform_2, window_bounds = array<i64: 1, 1, 64>}, {transform_indices = @transform_3, window_bounds = array<i64: 1, 64, 19>}, {pipeline_mode = #tpu.pipeline_mode<synchronous>, transform_indices = @transform_4, window_bounds = array<i64: 1, 19>}, {pipeline_mode = #tpu.pipeline_mode<synchronous>, transform_indices = @transform_5, window_bounds = array<i64: 1, 19>}, {transform_indices = @transform_6, window_bounds = array<i64: 1, 8, 3>}, {transform_indices = @transform_7, window_bounds = array<i64: 1, 8, 8, 35>}]} {
    %c0 = arith.constant 0 : index
    %c0_0 = arith.constant 0 : index
    %c0_1 = arith.constant 0 : index
    %0 = vector.load %arg1[%c0, %c0_0, %c0_1] : memref<1x8x1xi32, #tpu.memory_space<vmem>>, vector<1x8x1xi32>
    %1 = vector.shape_cast %0 : vector<1x8x1xi32> to vector<8x1xi32>
    %c0_2 = arith.constant 0 : index
    %c0_3 = arith.constant 0 : index
    %c0_4 = arith.constant 0 : index
    %2 = vector.load %arg2[%c0_2, %c0_3, %c0_4] : memref<1x3x64xf32, #tpu.memory_space<vmem>>, vector<1x3x64xf32>
    %3 = vector.shape_cast %2 : vector<1x3x64xf32> to vector<3x64xf32>
    %c0_5 = arith.constant 0 : index
    %c0_6 = arith.constant 0 : index
    %c0_7 = arith.constant 0 : index
    %4 = vector.load %arg3[%c0_5, %c0_6, %c0_7] : memref<1x1x64xf32, #tpu.memory_space<vmem>>, vector<1x1x64xf32>
    %5 = vector.shape_cast %4 : vector<1x1x64xf32> to vector<1x64xf32>
    %c0_8 = arith.constant 0 : index
    %c0_9 = arith.constant 0 : index
    %c0_10 = arith.constant 0 : index
    %6 = vector.load %arg4[%c0_8, %c0_9, %c0_10] : memref<1x64x19xf32, #tpu.memory_space<vmem>>, vector<1x64x19xf32>
    %7 = vector.shape_cast %6 : vector<1x64x19xf32> to vector<64x19xf32>
    %c0_11 = arith.constant 0 : index
    %c0_12 = arith.constant 0 : index
    %8 = vector.load %arg5[%c0_11, %c0_12] : memref<1x19xf32, #tpu.memory_space<vmem>>, vector<1x19xf32>
    %c0_13 = arith.constant 0 : index
    %c0_14 = arith.constant 0 : index
    %9 = vector.load %arg6[%c0_13, %c0_14] : memref<1x19xf32, #tpu.memory_space<vmem>>, vector<1x19xf32>
    %10 = tpu.iota {dimensions = array<i32: 1>} : vector<8x64xi32>
    %11 = vector.broadcast %1 : vector<8x1xi32> to vector<8x64xi32>
    %12 = arith.cmpi eq, %10, %11 : vector<8x64xi32>
    %13 = arith.extui %12 : vector<8x64xi1> to vector<8x64xi32>
    %14 = arith.sitofp %13 : vector<8x64xi32> to vector<8x64xf32>
    %cst = arith.constant dense<0.000000e+00> : vector<8x19xf32>
    %15 = tpu.matmul %14, %7, %cst {dimension_numbers = #tpu.dot_dimension_numbers<[1], [0], [0], [1], [0, 0, 1, 1], [], []>} : vector<8x64xf32>, vector<64x19xf32>, vector<8x19xf32> -> vector<8x19xf32>
    %16 = vector.extract_strided_slice %15 {offsets = [0, 0], sizes = [8, 16], strides = [1, 1]} : vector<8x19xf32> to vector<8x16xf32>
    %17 = vector.extract_strided_slice %15 {offsets = [0, 16], sizes = [8, 3], strides = [1, 1]} : vector<8x19xf32> to vector<8x3xf32>
    %c0_15 = arith.constant 0 : index
    %c0_16 = arith.constant 0 : index
    %c0_17 = arith.constant 0 : index
    %18 = vector.load %arg7[%c0_15, %c0_16, %c0_17] : memref<1x8x3xf32, #tpu.memory_space<vmem>>, vector<1x8x3xf32>
    %19 = vector.shape_cast %18 : vector<1x8x3xf32> to vector<8x3xf32>
    %20 = vector.shape_cast %17 : vector<8x3xf32> to vector<1x8x3xf32>
    tpu.vector_store %arg7[%c0_15, %c0_16, %c0_17], %20 {strides = array<i32>} : memref<1x8x3xf32, #tpu.memory_space<vmem>>, vector<1x8x3xf32>,
    %cst_18 = arith.constant dense<0.000000e+00> : vector<8x64xf32>
    %21 = tpu.matmul %17, %3, %cst_18 {dimension_numbers = #tpu.dot_dimension_numbers<[1], [0], [0], [1], [0, 0, 1, 1], [], []>} : vector<8x3xf32>, vector<3x64xf32>, vector<8x64xf32> -> vector<8x64xf32>
    %22 = arith.mulf %17, %17 : vector<8x3xf32>
    %cst_19 = arith.constant dense<0.000000e+00> : vector<8xf32>
    %23 = vector.multi_reduction <add>, %22, %cst_19 [1] : vector<8x3xf32> to vector<8xf32>
    %24 = vector.shape_cast %23 : vector<8xf32> to vector<8x1xf32>
    %cst_20 = arith.constant 2.000000e+00 : f32
    %25 = vector.broadcast %cst_20 : f32 to vector<8x64xf32>
    %26 = arith.mulf %25, %21 : vector<8x64xf32>
    %27 = vector.broadcast %24 : vector<8x1xf32> to vector<8x64xf32>
    %28 = arith.subf %27, %26 : vector<8x64xf32>
    %29 = vector.broadcast %5 : vector<1x64xf32> to vector<8x64xf32>
    %30 = arith.addf %28, %29 : vector<8x64xf32>
    %c0_21 = arith.constant 0 : index
    %c0_22 = arith.constant 0 : index
    %31 = vector.load %arg10[%c0_21, %c0_22] : memref<8x64xf32, #tpu.memory_space<vmem>>, vector<8x64xf32>
    tpu.vector_store %arg10[%c0_21, %c0_22], %30 {strides = array<i32>} : memref<8x64xf32, #tpu.memory_space<vmem>>, vector<8x64xf32>,
    %c0_i32 = arith.constant 0 : i32
    %c0_23 = arith.constant 0 : index
    %c0_24 = arith.constant 0 : index
    %32 = vector.load %arg10[%c0_23, %c0_24] : memref<8x64xf32, #tpu.memory_space<vmem>>, vector<8x64xf32>
    %cst_25 = arith.constant dense<0x7F800000> : vector<8xf32>
    %33 = vector.multi_reduction <minimumf>, %32, %cst_25 [1] : vector<8x64xf32> to vector<8xf32>
    %34 = vector.shape_cast %33 : vector<8xf32> to vector<8x1xf32>
    %35 = vector.broadcast %34 : vector<8x1xf32> to vector<8x64xf32>
    %36 = arith.cmpf oeq, %32, %35 : vector<8x64xf32>
    %c64_i32 = arith.constant 64 : i32
    %37 = vector.broadcast %c64_i32 : i32 to vector<8x64xi32>
    %38 = arith.select %36, %10, %37 : vector<8x64xi1>, vector<8x64xi32>
    %cst_26 = arith.constant dense<2147483647> : vector<8xi32>
    %39 = vector.multi_reduction <minsi>, %38, %cst_26 [1] : vector<8x64xi32> to vector<8xi32>
    %40 = vector.shape_cast %39 : vector<8xi32> to vector<8x1xi32>
    %41 = vector.broadcast %40 : vector<8x1xi32> to vector<8x64xi32>
    %42 = arith.cmpi eq, %10, %41 : vector<8x64xi32>
    %43 = arith.extui %42 : vector<8x64xi1> to vector<8x64xi32>
    %44 = arith.sitofp %43 : vector<8x64xi32> to vector<8x64xf32>
    %c8_i32 = arith.constant 8 : i32
    %45 = arith.muli %c0_i32, %c8_i32 : i32
    %46 = arith.index_cast %45 : i32 to index
    %c0_27 = arith.constant 0 : index
    %47 = vector.load %arg9[%46, %c0_27] : memref<64x64xf32, #tpu.memory_space<vmem>>, vector<8x64xf32>
    tpu.vector_store %arg9[%46, %c0_27], %44 {strides = array<i32>} : memref<64x64xf32, #tpu.memory_space<vmem>>, vector<8x64xf32>,
    %cst_28 = arith.constant 1.000000e+30 : f32
    %48 = vector.broadcast %cst_28 : f32 to vector<8x64xf32>
    %49 = arith.select %42, %48, %32 : vector<8x64xi1>, vector<8x64xf32>
    %c0_29 = arith.constant 0 : index
    %c0_30 = arith.constant 0 : index
    %50 = vector.load %arg10[%c0_29, %c0_30] : memref<8x64xf32, #tpu.memory_space<vmem>>, vector<8x64xf32>
    tpu.vector_store %arg10[%c0_29, %c0_30], %49 {strides = array<i32>} : memref<8x64xf32, #tpu.memory_space<vmem>>, vector<8x64xf32>,
    %c1_i32 = arith.constant 1 : i32
    %c0_31 = arith.constant 0 : index
    %c0_32 = arith.constant 0 : index
    %51 = vector.load %arg10[%c0_31, %c0_32] : memref<8x64xf32, #tpu.memory_space<vmem>>, vector<8x64xf32>
    %cst_33 = arith.constant dense<0x7F800000> : vector<8xf32>
    %52 = vector.multi_reduction <minimumf>, %51, %cst_33 [1] : vector<8x64xf32> to vector<8xf32>
    %53 = vector.shape_cast %52 : vector<8xf32> to vector<8x1xf32>
    %54 = vector.broadcast %53 : vector<8x1xf32> to vector<8x64xf32>
    %55 = arith.cmpf oeq, %51, %54 : vector<8x64xf32>
    %c64_i32_34 = arith.constant 64 : i32
    %56 = vector.broadcast %c64_i32_34 : i32 to vector<8x64xi32>
    %57 = arith.select %55, %10, %56 : vector<8x64xi1>, vector<8x64xi32>
    %cst_35 = arith.constant dense<2147483647> : vector<8xi32>
    %58 = vector.multi_reduction <minsi>, %57, %cst_35 [1] : vector<8x64xi32> to vector<8xi32>
    %59 = vector.shape_cast %58 : vector<8xi32> to vector<8x1xi32>
    %60 = vector.broadcast %59 : vector<8x1xi32> to vector<8x64xi32>
    %61 = arith.cmpi eq, %10, %60 : vector<8x64xi32>
    %62 = arith.extui %61 : vector<8x64xi1> to vector<8x64xi32>
    %63 = arith.sitofp %62 : vector<8x64xi32> to vector<8x64xf32>
    %c8_i32_36 = arith.constant 8 : i32
    %64 = arith.muli %c1_i32, %c8_i32_36 : i32
    %65 = arith.index_cast %64 : i32 to index
    %c0_37 = arith.constant 0 : index
    %66 = vector.load %arg9[%65, %c0_37] : memref<64x64xf32, #tpu.memory_space<vmem>>, vector<8x64xf32>
    tpu.vector_store %arg9[%65, %c0_37], %63 {strides = array<i32>} : memref<64x64xf32, #tpu.memory_space<vmem>>, vector<8x64xf32>,
    %cst_38 = arith.constant 1.000000e+30 : f32
    %67 = vector.broadcast %cst_38 : f32 to vector<8x64xf32>
    %68 = arith.select %61, %67, %51 : vector<8x64xi1>, vector<8x64xf32>
    %c0_39 = arith.constant 0 : index
    %c0_40 = arith.constant 0 : index
    %69 = vector.load %arg10[%c0_39, %c0_40] : memref<8x64xf32, #tpu.memory_space<vmem>>, vector<8x64xf32>
    tpu.vector_store %arg10[%c0_39, %c0_40], %68 {strides = array<i32>} : memref<8x64xf32, #tpu.memory_space<vmem>>, vector<8x64xf32>,
    %c2_i32 = arith.constant 2 : i32
    %c0_41 = arith.constant 0 : index
    %c0_42 = arith.constant 0 : index
    %70 = vector.load %arg10[%c0_41, %c0_42] : memref<8x64xf32, #tpu.memory_space<vmem>>, vector<8x64xf32>
    %cst_43 = arith.constant dense<0x7F800000> : vector<8xf32>
    %71 = vector.multi_reduction <minimumf>, %70, %cst_43 [1] : vector<8x64xf32> to vector<8xf32>
    %72 = vector.shape_cast %71 : vector<8xf32> to vector<8x1xf32>
    %73 = vector.broadcast %72 : vector<8x1xf32> to vector<8x64xf32>
    %74 = arith.cmpf oeq, %70, %73 : vector<8x64xf32>
    %c64_i32_44 = arith.constant 64 : i32
    %75 = vector.broadcast %c64_i32_44 : i32 to vector<8x64xi32>
    %76 = arith.select %74, %10, %75 : vector<8x64xi1>, vector<8x64xi32>
    %cst_45 = arith.constant dense<2147483647> : vector<8xi32>
    %77 = vector.multi_reduction <minsi>, %76, %cst_45 [1] : vector<8x64xi32> to vector<8xi32>
    %78 = vector.shape_cast %77 : vector<8xi32> to vector<8x1xi32>
    %79 = vector.broadcast %78 : vector<8x1xi32> to vector<8x64xi32>
    %80 = arith.cmpi eq, %10, %79 : vector<8x64xi32>
    %81 = arith.extui %80 : vector<8x64xi1> to vector<8x64xi32>
    %82 = arith.sitofp %81 : vector<8x64xi32> to vector<8x64xf32>
    %c8_i32_46 = arith.constant 8 : i32
    %83 = arith.muli %c2_i32, %c8_i32_46 : i32
    %84 = arith.index_cast %83 : i32 to index
    %c0_47 = arith.constant 0 : index
    %85 = vector.load %arg9[%84, %c0_47] : memref<64x64xf32, #tpu.memory_space<vmem>>, vector<8x64xf32>
    tpu.vector_store %arg9[%84, %c0_47], %82 {strides = array<i32>} : memref<64x64xf32, #tpu.memory_space<vmem>>, vector<8x64xf32>,
    %cst_48 = arith.constant 1.000000e+30 : f32
    %86 = vector.broadcast %cst_48 : f32 to vector<8x64xf32>
    %87 = arith.select %80, %86, %70 : vector<8x64xi1>, vector<8x64xf32>
    %c0_49 = arith.constant 0 : index
    %c0_50 = arith.constant 0 : index
    %88 = vector.load %arg10[%c0_49, %c0_50] : memref<8x64xf32, #tpu.memory_space<vmem>>, vector<8x64xf32>
    tpu.vector_store %arg10[%c0_49, %c0_50], %87 {strides = array<i32>} : memref<8x64xf32, #tpu.memory_space<vmem>>, vector<8x64xf32>,
    %c3_i32 = arith.constant 3 : i32
    %c0_51 = arith.constant 0 : index
    %c0_52 = arith.constant 0 : index
    %89 = vector.load %arg10[%c0_51, %c0_52] : memref<8x64xf32, #tpu.memory_space<vmem>>, vector<8x64xf32>
    %cst_53 = arith.constant dense<0x7F800000> : vector<8xf32>
    %90 = vector.multi_reduction <minimumf>, %89, %cst_53 [1] : vector<8x64xf32> to vector<8xf32>
    %91 = vector.shape_cast %90 : vector<8xf32> to vector<8x1xf32>
    %92 = vector.broadcast %91 : vector<8x1xf32> to vector<8x64xf32>
    %93 = arith.cmpf oeq, %89, %92 : vector<8x64xf32>
    %c64_i32_54 = arith.constant 64 : i32
    %94 = vector.broadcast %c64_i32_54 : i32 to vector<8x64xi32>
    %95 = arith.select %93, %10, %94 : vector<8x64xi1>, vector<8x64xi32>
    %cst_55 = arith.constant dense<2147483647> : vector<8xi32>
    %96 = vector.multi_reduction <minsi>, %95, %cst_55 [1] : vector<8x64xi32> to vector<8xi32>
    %97 = vector.shape_cast %96 : vector<8xi32> to vector<8x1xi32>
    %98 = vector.broadcast %97 : vector<8x1xi32> to vector<8x64xi32>
    %99 = arith.cmpi eq, %10, %98 : vector<8x64xi32>
    %100 = arith.extui %99 : vector<8x64xi1> to vector<8x64xi32>
    %101 = arith.sitofp %100 : vector<8x64xi32> to vector<8x64xf32>
    %c8_i32_56 = arith.constant 8 : i32
    %102 = arith.muli %c3_i32, %c8_i32_56 : i32
    %103 = arith.index_cast %102 : i32 to index
    %c0_57 = arith.constant 0 : index
    %104 = vector.load %arg9[%103, %c0_57] : memref<64x64xf32, #tpu.memory_space<vmem>>, vector<8x64xf32>
    tpu.vector_store %arg9[%103, %c0_57], %101 {strides = array<i32>} : memref<64x64xf32, #tpu.memory_space<vmem>>, vector<8x64xf32>,
    %cst_58 = arith.constant 1.000000e+30 : f32
    %105 = vector.broadcast %cst_58 : f32 to vector<8x64xf32>
    %106 = arith.select %99, %105, %89 : vector<8x64xi1>, vector<8x64xf32>
    %c0_59 = arith.constant 0 : index
    %c0_60 = arith.constant 0 : index
    %107 = vector.load %arg10[%c0_59, %c0_60] : memref<8x64xf32, #tpu.memory_space<vmem>>, vector<8x64xf32>
    tpu.vector_store %arg10[%c0_59, %c0_60], %106 {strides = array<i32>} : memref<8x64xf32, #tpu.memory_space<vmem>>, vector<8x64xf32>,
    %c4_i32 = arith.constant 4 : i32
    %c0_61 = arith.constant 0 : index
    %c0_62 = arith.constant 0 : index
    %108 = vector.load %arg10[%c0_61, %c0_62] : memref<8x64xf32, #tpu.memory_space<vmem>>, vector<8x64xf32>
    %cst_63 = arith.constant dense<0x7F800000> : vector<8xf32>
    %109 = vector.multi_reduction <minimumf>, %108, %cst_63 [1] : vector<8x64xf32> to vector<8xf32>
    %110 = vector.shape_cast %109 : vector<8xf32> to vector<8x1xf32>
    %111 = vector.broadcast %110 : vector<8x1xf32> to vector<8x64xf32>
    %112 = arith.cmpf oeq, %108, %111 : vector<8x64xf32>
    %c64_i32_64 = arith.constant 64 : i32
    %113 = vector.broadcast %c64_i32_64 : i32 to vector<8x64xi32>
    %114 = arith.select %112, %10, %113 : vector<8x64xi1>, vector<8x64xi32>
    %cst_65 = arith.constant dense<2147483647> : vector<8xi32>
    %115 = vector.multi_reduction <minsi>, %114, %cst_65 [1] : vector<8x64xi32> to vector<8xi32>
    %116 = vector.shape_cast %115 : vector<8xi32> to vector<8x1xi32>
    %117 = vector.broadcast %116 : vector<8x1xi32> to vector<8x64xi32>
    %118 = arith.cmpi eq, %10, %117 : vector<8x64xi32>
    %119 = arith.extui %118 : vector<8x64xi1> to vector<8x64xi32>
    %120 = arith.sitofp %119 : vector<8x64xi32> to vector<8x64xf32>
    %c8_i32_66 = arith.constant 8 : i32
    %121 = arith.muli %c4_i32, %c8_i32_66 : i32
    %122 = arith.index_cast %121 : i32 to index
    %c0_67 = arith.constant 0 : index
    %123 = vector.load %arg9[%122, %c0_67] : memref<64x64xf32, #tpu.memory_space<vmem>>, vector<8x64xf32>
    tpu.vector_store %arg9[%122, %c0_67], %120 {strides = array<i32>} : memref<64x64xf32, #tpu.memory_space<vmem>>, vector<8x64xf32>,
    %cst_68 = arith.constant 1.000000e+30 : f32
    %124 = vector.broadcast %cst_68 : f32 to vector<8x64xf32>
    %125 = arith.select %118, %124, %108 : vector<8x64xi1>, vector<8x64xf32>
    %c0_69 = arith.constant 0 : index
    %c0_70 = arith.constant 0 : index
    %126 = vector.load %arg10[%c0_69, %c0_70] : memref<8x64xf32, #tpu.memory_space<vmem>>, vector<8x64xf32>
    tpu.vector_store %arg10[%c0_69, %c0_70], %125 {strides = array<i32>} : memref<8x64xf32, #tpu.memory_space<vmem>>, vector<8x64xf32>,
    %c5_i32 = arith.constant 5 : i32
    %c0_71 = arith.constant 0 : index
    %c0_72 = arith.constant 0 : index
    %127 = vector.load %arg10[%c0_71, %c0_72] : memref<8x64xf32, #tpu.memory_space<vmem>>, vector<8x64xf32>
    %cst_73 = arith.constant dense<0x7F800000> : vector<8xf32>
    %128 = vector.multi_reduction <minimumf>, %127, %cst_73 [1] : vector<8x64xf32> to vector<8xf32>
    %129 = vector.shape_cast %128 : vector<8xf32> to vector<8x1xf32>
    %130 = vector.broadcast %129 : vector<8x1xf32> to vector<8x64xf32>
    %131 = arith.cmpf oeq, %127, %130 : vector<8x64xf32>
    %c64_i32_74 = arith.constant 64 : i32
    %132 = vector.broadcast %c64_i32_74 : i32 to vector<8x64xi32>
    %133 = arith.select %131, %10, %132 : vector<8x64xi1>, vector<8x64xi32>
    %cst_75 = arith.constant dense<2147483647> : vector<8xi32>
    %134 = vector.multi_reduction <minsi>, %133, %cst_75 [1] : vector<8x64xi32> to vector<8xi32>
    %135 = vector.shape_cast %134 : vector<8xi32> to vector<8x1xi32>
    %136 = vector.broadcast %135 : vector<8x1xi32> to vector<8x64xi32>
    %137 = arith.cmpi eq, %10, %136 : vector<8x64xi32>
    %138 = arith.extui %137 : vector<8x64xi1> to vector<8x64xi32>
    %139 = arith.sitofp %138 : vector<8x64xi32> to vector<8x64xf32>
    %c8_i32_76 = arith.constant 8 : i32
    %140 = arith.muli %c5_i32, %c8_i32_76 : i32
    %141 = arith.index_cast %140 : i32 to index
    %c0_77 = arith.constant 0 : index
    %142 = vector.load %arg9[%141, %c0_77] : memref<64x64xf32, #tpu.memory_space<vmem>>, vector<8x64xf32>
    tpu.vector_store %arg9[%141, %c0_77], %139 {strides = array<i32>} : memref<64x64xf32, #tpu.memory_space<vmem>>, vector<8x64xf32>,
    %cst_78 = arith.constant 1.000000e+30 : f32
    %143 = vector.broadcast %cst_78 : f32 to vector<8x64xf32>
    %144 = arith.select %137, %143, %127 : vector<8x64xi1>, vector<8x64xf32>
    %c0_79 = arith.constant 0 : index
    %c0_80 = arith.constant 0 : index
    %145 = vector.load %arg10[%c0_79, %c0_80] : memref<8x64xf32, #tpu.memory_space<vmem>>, vector<8x64xf32>
    tpu.vector_store %arg10[%c0_79, %c0_80], %144 {strides = array<i32>} : memref<8x64xf32, #tpu.memory_space<vmem>>, vector<8x64xf32>,
    %c6_i32 = arith.constant 6 : i32
    %c0_81 = arith.constant 0 : index
    %c0_82 = arith.constant 0 : index
    %146 = vector.load %arg10[%c0_81, %c0_82] : memref<8x64xf32, #tpu.memory_space<vmem>>, vector<8x64xf32>
    %cst_83 = arith.constant dense<0x7F800000> : vector<8xf32>
    %147 = vector.multi_reduction <minimumf>, %146, %cst_83 [1] : vector<8x64xf32> to vector<8xf32>
    %148 = vector.shape_cast %147 : vector<8xf32> to vector<8x1xf32>
    %149 = vector.broadcast %148 : vector<8x1xf32> to vector<8x64xf32>
    %150 = arith.cmpf oeq, %146, %149 : vector<8x64xf32>
    %c64_i32_84 = arith.constant 64 : i32
    %151 = vector.broadcast %c64_i32_84 : i32 to vector<8x64xi32>
    %152 = arith.select %150, %10, %151 : vector<8x64xi1>, vector<8x64xi32>
    %cst_85 = arith.constant dense<2147483647> : vector<8xi32>
    %153 = vector.multi_reduction <minsi>, %152, %cst_85 [1] : vector<8x64xi32> to vector<8xi32>
    %154 = vector.shape_cast %153 : vector<8xi32> to vector<8x1xi32>
    %155 = vector.broadcast %154 : vector<8x1xi32> to vector<8x64xi32>
    %156 = arith.cmpi eq, %10, %155 : vector<8x64xi32>
    %157 = arith.extui %156 : vector<8x64xi1> to vector<8x64xi32>
    %158 = arith.sitofp %157 : vector<8x64xi32> to vector<8x64xf32>
    %c8_i32_86 = arith.constant 8 : i32
    %159 = arith.muli %c6_i32, %c8_i32_86 : i32
    %160 = arith.index_cast %159 : i32 to index
    %c0_87 = arith.constant 0 : index
    %161 = vector.load %arg9[%160, %c0_87] : memref<64x64xf32, #tpu.memory_space<vmem>>, vector<8x64xf32>
    tpu.vector_store %arg9[%160, %c0_87], %158 {strides = array<i32>} : memref<64x64xf32, #tpu.memory_space<vmem>>, vector<8x64xf32>,
    %cst_88 = arith.constant 1.000000e+30 : f32
    %162 = vector.broadcast %cst_88 : f32 to vector<8x64xf32>
    %163 = arith.select %156, %162, %146 : vector<8x64xi1>, vector<8x64xf32>
    %c0_89 = arith.constant 0 : index
    %c0_90 = arith.constant 0 : index
    %164 = vector.load %arg10[%c0_89, %c0_90] : memref<8x64xf32, #tpu.memory_space<vmem>>, vector<8x64xf32>
    tpu.vector_store %arg10[%c0_89, %c0_90], %163 {strides = array<i32>} : memref<8x64xf32, #tpu.memory_space<vmem>>, vector<8x64xf32>,
    %c7_i32 = arith.constant 7 : i32
    %c0_91 = arith.constant 0 : index
    %c0_92 = arith.constant 0 : index
    %165 = vector.load %arg10[%c0_91, %c0_92] : memref<8x64xf32, #tpu.memory_space<vmem>>, vector<8x64xf32>
    %cst_93 = arith.constant dense<0x7F800000> : vector<8xf32>
    %166 = vector.multi_reduction <minimumf>, %165, %cst_93 [1] : vector<8x64xf32> to vector<8xf32>
    %167 = vector.shape_cast %166 : vector<8xf32> to vector<8x1xf32>
    %168 = vector.broadcast %167 : vector<8x1xf32> to vector<8x64xf32>
    %169 = arith.cmpf oeq, %165, %168 : vector<8x64xf32>
    %c64_i32_94 = arith.constant 64 : i32
    %170 = vector.broadcast %c64_i32_94 : i32 to vector<8x64xi32>
    %171 = arith.select %169, %10, %170 : vector<8x64xi1>, vector<8x64xi32>
    %cst_95 = arith.constant dense<2147483647> : vector<8xi32>
    %172 = vector.multi_reduction <minsi>, %171, %cst_95 [1] : vector<8x64xi32> to vector<8xi32>
    %173 = vector.shape_cast %172 : vector<8xi32> to vector<8x1xi32>
    %174 = vector.broadcast %173 : vector<8x1xi32> to vector<8x64xi32>
    %175 = arith.cmpi eq, %10, %174 : vector<8x64xi32>
    %176 = arith.extui %175 : vector<8x64xi1> to vector<8x64xi32>
    %177 = arith.sitofp %176 : vector<8x64xi32> to vector<8x64xf32>
    %c8_i32_96 = arith.constant 8 : i32
    %178 = arith.muli %c7_i32, %c8_i32_96 : i32
    %179 = arith.index_cast %178 : i32 to index
    %c0_97 = arith.constant 0 : index
    %180 = vector.load %arg9[%179, %c0_97] : memref<64x64xf32, #tpu.memory_space<vmem>>, vector<8x64xf32>
    tpu.vector_store %arg9[%179, %c0_97], %177 {strides = array<i32>} : memref<64x64xf32, #tpu.memory_space<vmem>>, vector<8x64xf32>,
    %cst_98 = arith.constant 1.000000e+30 : f32
    %181 = vector.broadcast %cst_98 : f32 to vector<8x64xf32>
    %182 = arith.select %175, %181, %165 : vector<8x64xi1>, vector<8x64xf32>
    %c0_99 = arith.constant 0 : index
    %c0_100 = arith.constant 0 : index
    %183 = vector.load %arg10[%c0_99, %c0_100] : memref<8x64xf32, #tpu.memory_space<vmem>>, vector<8x64xf32>
    tpu.vector_store %arg10[%c0_99, %c0_100], %182 {strides = array<i32>} : memref<8x64xf32, #tpu.memory_space<vmem>>, vector<8x64xf32>,
    %c8_i32_101 = arith.constant 8 : i32
    %c0_102 = arith.constant 0 : index
    %c0_103 = arith.constant 0 : index
    %184 = vector.load %arg9[%c0_102, %c0_103] : memref<64x64xf32, #tpu.memory_space<vmem>>, vector<64x64xf32>
    %cst_104 = arith.constant dense<0.000000e+00> : vector<64x19xf32>
    %185 = tpu.matmul %184, %7, %cst_104 {dimension_numbers = #tpu.dot_dimension_numbers<[1], [0], [0], [1], [0, 0, 1, 1], [], []>} : vector<64x64xf32>, vector<64x19xf32>, vector<64x19xf32> -> vector<64x19xf32>
    %186 = vector.shape_cast %185 : vector<64x19xf32> to vector<8x8x19xf32>
    %cst_105 = arith.constant dense<0.000000e+00> : vector<8x19xf32>
    %187 = vector.multi_reduction <add>, %186, %cst_105 [0] : vector<8x8x19xf32> to vector<8x19xf32>
    %188 = vector.shape_cast %187 : vector<8x19xf32> to vector<1x8x19xf32>
    %cst_106 = arith.constant 1.250000e-01 : f32
    %189 = vector.broadcast %cst_106 : f32 to vector<1x8x19xf32>
    %190 = arith.mulf %188, %189 : vector<1x8x19xf32>
    %191 = vector.broadcast %190 : vector<1x8x19xf32> to vector<8x8x19xf32>
    %192 = arith.subf %186, %191 : vector<8x8x19xf32>
    %193 = vector.shape_cast %192 : vector<8x8x19xf32> to vector<64x19xf32>
    %194 = vector.shape_cast %193 : vector<64x19xf32> to vector<1x64x19xf32>
    %cst_107 = arith.constant dense<0.000000e+00> : vector<1xf32>
    %195 = vector.multi_reduction <add>, %194, %cst_107 [1, 2] : vector<1x64x19xf32> to vector<1xf32>
    %196 = vector.shape_cast %195 : vector<1xf32> to vector<1x1x1xf32>
    %197 = vector.extract %196[0, 0, 0] : f32 from vector<1x1x1xf32>
    %198 = vector.broadcast %197 : f32 to vector<1x1xf32>
    %cst_108 = arith.constant 8.22368427E-4 : f32
    %199 = vector.broadcast %cst_108 : f32 to vector<1x1xf32>
    %200 = arith.mulf %198, %199 : vector<1x1xf32>
    %201 = vector.broadcast %200 : vector<1x1xf32> to vector<64x19xf32>
    %202 = arith.subf %193, %201 : vector<64x19xf32>
    %203 = arith.mulf %202, %202 : vector<64x19xf32>
    %204 = vector.shape_cast %203 : vector<64x19xf32> to vector<1x64x19xf32>
    %cst_109 = arith.constant dense<0.000000e+00> : vector<1xf32>
    %205 = vector.multi_reduction <add>, %204, %cst_109 [1, 2] : vector<1x64x19xf32> to vector<1xf32>
    %206 = vector.shape_cast %205 : vector<1xf32> to vector<1x1x1xf32>
    %207 = vector.extract %206[0, 0, 0] : f32 from vector<1x1x1xf32>
    %208 = vector.broadcast %207 : f32 to vector<1x1xf32>
    %cst_110 = arith.constant 8.23045265E-4 : f32
    %209 = vector.broadcast %cst_110 : f32 to vector<1x1xf32>
    %210 = arith.mulf %208, %209 : vector<1x1xf32>
    %211 = math.sqrt %210 : vector<1x1xf32>
    %cst_111 = arith.constant 9.99999974E-6 : f32
    %212 = vector.broadcast %cst_111 : f32 to vector<1x1xf32>
    %213 = arith.addf %211, %212 : vector<1x1xf32>
    %cst_112 = arith.constant 1.000000e+00 : f32
    %214 = vector.broadcast %cst_112 : f32 to vector<1x1xf32>
    %215 = arith.divf %214, %213 : vector<1x1xf32>
    %216 = vector.shape_cast %215 : vector<1x1xf32> to vector<1x1x1xf32>
    %217 = vector.broadcast %216 : vector<1x1x1xf32> to vector<8x8x19xf32>
    %218 = arith.mulf %192, %217 : vector<8x8x19xf32>
    %219 = vector.shape_cast %8 : vector<1x19xf32> to vector<1x1x19xf32>
    %220 = vector.broadcast %219 : vector<1x1x19xf32> to vector<8x8x19xf32>
    %221 = arith.mulf %220, %218 : vector<8x8x19xf32>
    %222 = vector.shape_cast %9 : vector<1x19xf32> to vector<1x1x19xf32>
    %223 = vector.broadcast %222 : vector<1x1x19xf32> to vector<8x8x19xf32>
    %224 = arith.addf %221, %223 : vector<8x8x19xf32>
    %225 = vector.shape_cast %16 : vector<8x16xf32> to vector<1x8x16xf32>
    %226 = vector.shape_cast %225 : vector<1x8x16xf32> to vector<1x8x16xf32>
    %227 = vector.broadcast %226 : vector<1x8x16xf32> to vector<8x8x16xf32>
    %228 = tpu.concatenate %224, %227 in 2 : vector<8x8x19xf32>, vector<8x8x16xf32> -> vector<8x8x35xf32>
    %c0_113 = arith.constant 0 : index
    %c0_114 = arith.constant 0 : index
    %c0_115 = arith.constant 0 : index
    %c0_116 = arith.constant 0 : index
    %229 = vector.load %arg8[%c0_113, %c0_114, %c0_115, %c0_116] : memref<1x8x8x35xf32, #tpu.memory_space<vmem>>, vector<1x8x8x35xf32>
    %230 = vector.shape_cast %229 : vector<1x8x8x35xf32> to vector<8x8x35xf32>
    %231 = vector.shape_cast %228 : vector<8x8x35xf32> to vector<1x8x8x35xf32>
    tpu.vector_store %arg8[%c0_113, %c0_114, %c0_115, %c0_116], %231 {strides = array<i32>} : memref<1x8x8x35xf32, #tpu.memory_space<vmem>>, vector<1x8x8x35xf32>,
    return
  }
  func.func @transform_0(%arg0: i32) -> (i32, i32, i32) {
    %c0_i32 = arith.constant 0 : i32
    %c0_i32_0 = arith.constant 0 : i32
    %c0_i32_1 = arith.constant 0 : i32
    return %arg0, %c0_i32, %c0_i32_0 : i32, i32, i32
  }
  func.func @transform_1(%arg0: i32) -> (i32, i32, i32) {
    %c0_i32 = arith.constant 0 : i32
    %c0_i32_0 = arith.constant 0 : i32
    %c0_i32_1 = arith.constant 0 : i32
    return %arg0, %c0_i32, %c0_i32_0 : i32, i32, i32
  }
  func.func @transform_2(%arg0: i32) -> (i32, i32, i32) {
    %c0_i32 = arith.constant 0 : i32
    %c0_i32_0 = arith.constant 0 : i32
    %c0_i32_1 = arith.constant 0 : i32
    return %arg0, %c0_i32, %c0_i32_0 : i32, i32, i32
  }
  func.func @transform_3(%arg0: i32) -> (i32, i32, i32) {
    %c0_i32 = arith.constant 0 : i32
    %c0_i32_0 = arith.constant 0 : i32
    %c0_i32_1 = arith.constant 0 : i32
    return %arg0, %c0_i32, %c0_i32_0 : i32, i32, i32
  }
  func.func @transform_4(%arg0: i32) -> (i32, i32) {
    %c0_i32 = arith.constant 0 : i32
    %c0_i32_0 = arith.constant 0 : i32
    %c0_i32_1 = arith.constant 0 : i32
    return %c0_i32, %c0_i32_0 : i32, i32
  }
  func.func @transform_5(%arg0: i32) -> (i32, i32) {
    %c0_i32 = arith.constant 0 : i32
    %c0_i32_0 = arith.constant 0 : i32
    %c0_i32_1 = arith.constant 0 : i32
    return %c0_i32, %c0_i32_0 : i32, i32
  }
  func.func @transform_6(%arg0: i32) -> (i32, i32, i32) {
    %c0_i32 = arith.constant 0 : i32
    %c0_i32_0 = arith.constant 0 : i32
    %c0_i32_1 = arith.constant 0 : i32
    return %arg0, %c0_i32, %c0_i32_0 : i32, i32, i32
  }
  func.func @transform_7(%arg0: i32) -> (i32, i32, i32, i32) {
    %c0_i32 = arith.constant 0 : i32
    %c0_i32_0 = arith.constant 0 : i32
    %c0_i32_1 = arith.constant 0 : i32
    %c0_i32_2 = arith.constant 0 : i32
    return %arg0, %c0_i32, %c0_i32_0, %c0_i32_1 : i32, i32, i32, i32
  }
}

</mosaic_0001>

<llo_original>
// kernel: custom-call.2
$region0: #{custom-call.2}
  %s0 = inlined_call_operand.vmem [shape: f32[2,64], index: 0, kind: output, shape index: {}]

// kernel: run.1
$region0: #{run.1}
  #allocation0 [shape = 'u32[]', space=smem, size = 0x4, offset = 0x4, fixed_abs, tag = 'smem constant byte address 0x4 - core index']
  #allocation1 [shape = 'u32[144,128]{1,0:T(1,128)}', space=vmem, size = 0x12000, scoped, tag = 'internal scratch']
  #allocation2 [shape = 'f32[64,64]{1,0:T(8,128)}', space=vmem, size = 0x8000, scoped, tag = 'scratch operand']
  #allocation3 [shape = 'f32[8,64]{1,0:T(8,128)}', space=vmem, size = 0x1000, scoped, tag = 'scratch operand']
  %s0 = inlined_call_operand.vmem [shape: s32[2,8,1], index: 0, kind: input, shape index: {}]
  %s1 = inlined_call_operand.vmem [shape: f32[2,3,64], index: 1, kind: input, shape index: {}]
  %s2 = inlined_call_operand.vmem [shape: f32[2,1,64], index: 2, kind: input, shape index: {}]
  %s3 = inlined_call_operand.vmem [shape: f32[2,64,19], index: 3, kind: input, shape index: {}]
  %s4 = inlined_call_operand.vmem [shape: f32[1,19], index: 4, kind: input, shape index: {}]
  %s5 = inlined_call_operand.vmem [shape: f32[1,19], index: 5, kind: input, shape index: {}]
  %s6 = inlined_call_operand.vmem [shape: f32[2,8,3], index: 6, kind: output, shape index: {0}]
  %s7 = inlined_call_operand.vmem [shape: f32[2,8,8,35], index: 7, kind: output, shape index: {1}]
  %8 = xla_tuple %s6, %s7
  %s9 = sld [smem:[#allocation0]]
  $region65: #{run.1} parent=0
    _
  %s11 = ssub.s32 1, %s9
  %s12 = scalar_select 0, %s11, %s9
  loop: start=0, step=1, limit=4
  $region2: #{run.1} parent=0 // loop_pre_header
    _
  $region3: #{run.1} parent=0 // loop_header
    %s14 = sphi 0, %s18
    %p15 = scmp.ge.s32.totalorder %s14, 4
    %s24 = sphi 0, %s26
    %s27 = sphi 0, %s24
    %s28 = sphi 0, %s27
    %s44 = sphi 0, %s28
    %s50 = sphi 0, %s52
    %s53 = sphi 0, %s50
    %s54 = sphi 0, %s53
    %s70 = sphi 0, %s54
    %s76 = sphi 0, %s78
    %s79 = sphi 0, %s76
    %s80 = sphi 0, %s79
    %s96 = sphi 0, %s80
    %s102 = sphi 0, %s104
    %s105 = sphi 0, %s102
    %s106 = sphi 0, %s105
    %s122 = sphi 0, %s106
    %s126 = sphi 0, %s126
    %s128 = sphi 0, %s126
    %s129 = sphi 0, %s128
    %s143 = sphi 0, %s129
    %s147 = sphi 0, %s147
    %s149 = sphi 0, %s147
    %s150 = sphi 0, %s149
    %s164 = sphi 0, %s150
    %s170 = sphi 0, %s172
    %s173 = sphi 0, %s170
    %s174 = sphi 0, %s173
    %s190 = sphi 0, %s174
    %s196 = sphi 0, %s198
    %s199 = sphi 0, %s196
    %s200 = sphi 0, %s199
    %s216 = sphi 0, %s200
  $region4: #{run.1} parent=0 // loop_header_branch
    %17 = sbr.rel (%p15) target = $region8
  $region5: #{run.1} parent=0 // loop_body
    %s19 = ssub.s32 %s14, 1
    %s20 = ssub.s32 %s14, 2
    %s21 = sadd.s32 %s14, 1
    %s22 = ssub.s32 %s14, %s21
    %p23 = scmp.eq.s32.totalorder %s22, 0
    %s25 = sadd.s32 %s24, 1
    %s26 = scalar_select %p23, %s24, %s25
    %p29 = pneg %p23
    %p30 = scmp.eq.s32.totalorder %s14, 1
    %p31 = por %p29, %p30
    %p32 = scmp.ne.s32.totalorder %s24, %s27
    %p33 = scmp.eq.s32.totalorder %s14, 0
    %p34 = por %p32, %p33
    %p35 = scmp.ne.s32.totalorder %s24, %s27
    %p36 = scmp.eq.s32.totalorder %s19, 1
    %p37 = por %p35, %p36
    %p38 = scmp.ne.s32.totalorder %s27, %s28
    %p39 = scmp.eq.s32.totalorder %s19, 0
    %p40 = por %p38, %p39
    %p41 = scmp.ne.s32.totalorder %s27, %s28
    %p42 = scmp.eq.s32.totalorder %s20, 1
    %p43 = por %p41, %p42
    %p45 = scmp.ne.s32.totalorder %s28, %s44
    %p46 = scmp.eq.s32.totalorder %s20, 0
    %p47 = por %p45, %p46
    %s48 = ssub.s32 %s14, %s21
    %p49 = scmp.eq.s32.totalorder %s48, 0
    %s51 = sadd.s32 %s50, 1
    %s52 = scalar_select %p49, %s50, %s51
    %p55 = pneg %p49
    %p56 = scmp.eq.s32.totalorder %s14, 1
    %p57 = por %p55, %p56
    %p58 = scmp.ne.s32.totalorder %s50, %s53
    %p59 = scmp.eq.s32.totalorder %s14, 0
    %p60 = por %p58, %p59
    %p61 = scmp.ne.s32.totalorder %s50, %s53
    %p62 = scmp.eq.s32.totalorder %s19, 1
    %p63 = por %p61, %p62
    %p64 = scmp.ne.s32.totalorder %s53, %s54
    %p65 = scmp.eq.s32.totalorder %s19, 0
    %p66 = por %p64, %p65
    %p67 = scmp.ne.s32.totalorder %s53, %s54
    %p68 = scmp.eq.s32.totalorder %s20, 1
    %p69 = por %p67, %p68
    %p71 = scmp.ne.s32.totalorder %s54, %s70
    %p72 = scmp.eq.s32.totalorder %s20, 0
    %p73 = por %p71, %p72
    %s74 = ssub.s32 %s14, %s21
    %p75 = scmp.eq.s32.totalorder %s74, 0
    %s77 = sadd.s32 %s76, 1
    %s78 = scalar_select %p75, %s76, %s77
    %p81 = pneg %p75
    %p82 = scmp.eq.s32.totalorder %s14, 1
    %p83 = por %p81, %p82
    %p84 = scmp.ne.s32.totalorder %s76, %s79
    %p85 = scmp.eq.s32.totalorder %s14, 0
    %p86 = por %p84, %p85
    %p87 = scmp.ne.s32.totalorder %s76, %s79
    %p88 = scmp.eq.s32.totalorder %s19, 1
    %p89 = por %p87, %p88
    %p90 = scmp.ne.s32.totalorder %s79, %s80
    %p91 = scmp.eq.s32.totalorder %s19, 0
    %p92 = por %p90, %p91
    %p93 = scmp.ne.s32.totalorder %s79, %s80
    %p94 = scmp.eq.s32.totalorder %s20, 1
    %p95 = por %p93, %p94
    %p97 = scmp.ne.s32.totalorder %s80, %s96
    %p98 = scmp.eq.s32.totalorder %s20, 0
    %p99 = por %p97, %p98
    %s100 = ssub.s32 %s14, %s21
    %p101 = scmp.eq.s32.totalorder %s100, 0
    %s103 = sadd.s32 %s102, 1
    %s104 = scalar_select %p101, %s102, %s103
    %p107 = pneg %p101
    %p108 = scmp.eq.s32.totalorder %s14, 1
    %p109 = por %p107, %p108
    %p110 = scmp.ne.s32.totalorder %s102, %s105
    %p111 = scmp.eq.s32.totalorder %s14, 0
    %p112 = por %p110, %p111
    %p113 = scmp.ne.s32.totalorder %s102, %s105
    %p114 = scmp.eq.s32.totalorder %s19, 1
    %p115 = por %p113, %p114
    %p116 = scmp.ne.s32.totalorder %s105, %s106
    %p117 = scmp.eq.s32.totalorder %s19, 0
    %p118 = por %p116, %p117
    %p119 = scmp.ne.s32.totalorder %s105, %s106
    %p120 = scmp.eq.s32.totalorder %s20, 1
    %p121 = por %p119, %p120
    %p123 = scmp.ne.s32.totalorder %s106, %s122
    %p124 = scmp.eq.s32.totalorder %s20, 0
    %p125 = por %p123, %p124
    %s127 = sadd.s32 %s126, 1
    %p130 = scmp.eq.s32.totalorder %s14, 1
    %p131 = scmp.ne.s32.totalorder %s126, %s128
    %p132 = scmp.eq.s32.totalorder %s14, 0
    %p133 = por %p131, %p132
    %p134 = scmp.ne.s32.totalorder %s126, %s128
    %p135 = scmp.eq.s32.totalorder %s19, 1
    %p136 = por %p134, %p135
    %p137 = scmp.ne.s32.totalorder %s128, %s129
    %p138 = scmp.eq.s32.totalorder %s19, 0
    %p139 = por %p137, %p138
    %p140 = scmp.ne.s32.totalorder %s128, %s129
    %p141 = scmp.eq.s32.totalorder %s20, 1
    %p142 = por %p140, %p141
    %p144 = scmp.ne.s32.totalorder %s129, %s143
    %p145 = scmp.eq.s32.totalorder %s20, 0
    %p146 = por %p144, %p145
    %s148 = sadd.s32 %s147, 1
    %p151 = scmp.eq.s32.totalorder %s14, 1
    %p152 = scmp.ne.s32.totalorder %s147, %s149
    %p153 = scmp.eq.s32.totalorder %s14, 0
    %p154 = por %p152, %p153
    %p155 = scmp.ne.s32.totalorder %s147, %s149
    %p156 = scmp.eq.s32.totalorder %s19, 1
    %p157 = por %p155, %p156
    %p158 = scmp.ne.s32.totalorder %s149, %s150
    %p159 = scmp.eq.s32.totalorder %s19, 0
    %p160 = por %p158, %p159
    %p161 = scmp.ne.s32.totalorder %s149, %s150
    %p162 = scmp.eq.s32.totalorder %s20, 1
    %p163 = por %p161, %p162
    %p165 = scmp.ne.s32.totalorder %s150, %s164
    %p166 = scmp.eq.s32.totalorder %s20, 0
    %p167 = por %p165, %p166
    %s168 = ssub.s32 %s14, %s21
    %p169 = scmp.eq.s32.totalorder %s168, 0
    %s171 = sadd.s32 %s170, 1
    %s172 = scalar_select %p169, %s170, %s171
    %p175 = pneg %p169
    %p176 = scmp.eq.s32.totalorder %s14, 1
    %p177 = por %p175, %p176
    %p178 = scmp.ne.s32.totalorder %s170, %s173
    %p179 = scmp.eq.s32.totalorder %s14, 0
    %p180 = por %p178, %p179
    %p181 = scmp.ne.s32.totalorder %s170, %s173
    %p182 = scmp.eq.s32.totalorder %s19, 1
    %p183 = por %p181, %p182
    %p184 = scmp.ne.s32.totalorder %s173, %s174
    %p185 = scmp.eq.s32.totalorder %s19, 0
    %p186 = por %p184, %p185
    %p187 = scmp.ne.s32.totalorder %s173, %s174
    %p188 = scmp.eq.s32.totalorder %s20, 1
    %p189 = por %p187, %p188
    %p191 = scmp.ne.s32.totalorder %s174, %s190
    %p192 = scmp.eq.s32.totalorder %s20, 0
    %p193 = por %p191, %p192
    %s194 = ssub.s32 %s14, %s21
    %p195 = scmp.eq.s32.totalorder %s194, 0
    %s197 = sadd.s32 %s196, 1
    %s198 = scalar_select %p195, %s196, %s197
    %p201 = pneg %p195
    %p202 = scmp.eq.s32.totalorder %s14, 1
    %p203 = por %p201, %p202
    %p204 = scmp.ne.s32.totalorder %s196, %s199
    %p205 = scmp.eq.s32.totalorder %s14, 0
    %p206 = por %p204, %p205
    %p207 = scmp.ne.s32.totalorder %s196, %s199
    %p208 = scmp.eq.s32.totalorder %s19, 1
    %p209 = por %p207, %p208
    %p210 = scmp.ne.s32.totalorder %s199, %s200
    %p211 = scmp.eq.s32.totalorder %s19, 0
    %p212 = por %p210, %p211
    %p213 = scmp.ne.s32.totalorder %s199, %s200
    %p214 = scmp.eq.s32.totalorder %s20, 1
    %p215 = por %p213, %p214
    %p217 = scmp.ne.s32.totalorder %s200, %s216
    %p218 = scmp.eq.s32.totalorder %s20, 0
    %p219 = por %p217, %p218
    %p220 = scmp.le.s32.totalorder 1, %s14
    %p221 = scmp.lt.s32.totalorder %s14, 3
    %p222 = pnand %p220, %p221
    %p223 = pneg %p222
    // Predicated region
    $region9: #{run.1} parent=5 // pred_check
      _
    $region10: #{run.1} parent=5 // pred_check_branch
      %225 = sbr.rel (%p222) target = $region12
    $region11: #{run.1} parent=5 // pred_region
      %s226 = ssub.s32 %s14, 1
      // Predicated region
      $region13: #{run.1} parent=11 // pred_check
        %p227 = pneg %p139
      $region14: #{run.1} parent=11 // pred_check_branch
        %229 = sbr.rel (%p227) target = $region16
      $region15: #{run.1} parent=11 // pred_region
        _
      $region16: #{run.1} parent=11 // pred_fallthru
        _
      // Predicated region
      $region17: #{run.1} parent=11 // pred_check
        %p230 = pneg %p160
      $region18: #{run.1} parent=11 // pred_check_branch
        %232 = sbr.rel (%p230) target = $region20
      $region19: #{run.1} parent=11 // pred_region
        _
      $region20: #{run.1} parent=11 // pred_fallthru
        _
    $region12: #{run.1} parent=5 // pred_fallthru
      _
    %p233 = scmp.lt.s32.totalorder %s14, 2
    // Predicated region
    $region21: #{run.1} parent=5 // pred_check
      %p234 = pneg %p233
    $region22: #{run.1} parent=5 // pred_check_branch
      %236 = sbr.rel (%p234) target = $region24
    $region23: #{run.1} parent=5 // pred_region
      // Predicated region
      $region25: #{run.1} parent=23 // pred_check
        %p237 = pneg %p34
      $region26: #{run.1} parent=23 // pred_check_branch
        %239 = sbr.rel (%p237) target = $region28
      $region27: #{run.1} parent=23 // pred_region
        %p240 = scmp.lt.s32.totalorder %s14, 1
        %s241 = scalar_select %p240, %s14, 1
        %s242 = smul.addr %s241, 8
        %s243 = scalar_lea.vmem %s0, %s242
      $region28: #{run.1} parent=23 // pred_fallthru
        _
      // Predicated region
      $region29: #{run.1} parent=23 // pred_check
        %p244 = pneg %p60
      $region30: #{run.1} parent=23 // pred_check_branch
        %246 = sbr.rel (%p244) target = $region32
      $region31: #{run.1} parent=23 // pred_region
        %p247 = scmp.lt.s32.totalorder %s14, 1
        %s248 = scalar_select %p247, %s14, 1
        %s249 = smul.addr %s248, 4
        %s250 = scalar_lea.vmem %s1, %s249
      $region32: #{run.1} parent=23 // pred_fallthru
        _
      // Predicated region
      $region33: #{run.1} parent=23 // pred_check
        %p251 = pneg %p86
      $region34: #{run.1} parent=23 // pred_check_branch
        %253 = sbr.rel (%p251) target = $region36
      $region35: #{run.1} parent=23 // pred_region
        %p254 = scmp.lt.s32.totalorder %s14, 1
        %s255 = scalar_select %p254, %s14, 1
        %s256 = scalar_lea.vmem %s2, %s255
      $region36: #{run.1} parent=23 // pred_fallthru
        _
      // Predicated region
      $region37: #{run.1} parent=23 // pred_check
        %p257 = pneg %p112
      $region38: #{run.1} parent=23 // pred_check_branch
        %259 = sbr.rel (%p257) target = $region40
      $region39: #{run.1} parent=23 // pred_region
        %p260 = scmp.lt.s32.totalorder %s14, 1
        %s261 = scalar_select %p260, %s14, 1
        %s262 = smul.addr %s261, 8
        %s263 = smul.addr %s262, 8
        %s264 = scalar_lea.vmem %s3, %s263
      $region40: #{run.1} parent=23 // pred_fallthru
        _
    $region24: #{run.1} parent=5 // pred_fallthru
      _
    %p265 = scmp.le.s32.totalorder 1, %s14
    %p266 = scmp.lt.s32.totalorder %s14, 3
    %p267 = pnand %p265, %p266
    %p268 = pneg %p267
    // Predicated region
    $region41: #{run.1} parent=5 // pred_check
      _
    $region42: #{run.1} parent=5 // pred_check_branch
      %270 = sbr.rel (%p267) target = $region44
    $region43: #{run.1} parent=5 // pred_region
      %s271 = ssub.s32 %s14, 1
      %p272 = scmp.lt.s32.totalorder %s19, 1
      %s273 = scalar_select %p272, %s19, 1
      %s274 = smul.addr %s273, 8
      %s275 = scalar_lea.vmem %s0, %s274
      %p276 = pneg %p40
      %p277 = pneg %p37
      %p278 = scmp.lt.s32.totalorder %s19, 1
      %s279 = scalar_select %p278, %s19, 1
      %s280 = smul.addr %s279, 4
      %s281 = scalar_lea.vmem %s1, %s280
      %p282 = pneg %p66
      %p283 = pneg %p63
      %p284 = scmp.lt.s32.totalorder %s19, 1
      %s285 = scalar_select %p284, %s19, 1
      %s286 = scalar_lea.vmem %s2, %s285
      %p287 = pneg %p92
      %p288 = pneg %p89
      %p289 = scmp.lt.s32.totalorder %s19, 1
      %s290 = scalar_select %p289, %s19, 1
      %s291 = smul.addr %s290, 8
      %s292 = smul.addr %s291, 8
      %s293 = scalar_lea.vmem %s3, %s292
      %p294 = pneg %p118
      %p295 = pneg %p115
      %p296 = pneg %p139
      %p297 = pneg %p136
      %p298 = pneg %p160
      %p299 = pneg %p157
      %p300 = pneg %p186
      %p301 = pneg %p183
      %p302 = scmp.lt.s32.totalorder %s19, 1
      %s303 = scalar_select %p302, %s19, 1
      %s304 = smul.addr %s303, 8
      %s305 = scalar_lea.vmem %s6, %s304
      %p306 = pneg %p212
      %p307 = pneg %p209
      %p308 = scmp.lt.s32.totalorder %s19, 1
      %s309 = scalar_select %p308, %s19, 1
      %s310 = smul.addr %s309, 8
      %s311 = smul.addr %s310, 8
      %s312 = scalar_lea.vmem %s7, %s311
      %p313 = scmp.lt.s32.totalorder %s19, 1
      %s314 = scalar_select %p313, %s19, 1
      %s315 = smul.addr %s314, 8
      %s316 = scalar_lea.vmem %s0, %s315
      %p317 = scmp.lt.s32.totalorder %s19, 1
      %s318 = scalar_select %p317, %s19, 1
      %s319 = smul.addr %s318, 4
      %s320 = scalar_lea.vmem %s1, %s319
      %p321 = scmp.lt.s32.totalorder %s19, 1
      %s322 = scalar_select %p321, %s19, 1
      %s323 = scalar_lea.vmem %s2, %s322
      %p324 = scmp.lt.s32.totalorder %s19, 1
      %s325 = scalar_select %p324, %s19, 1
      %s326 = smul.addr %s325, 8
      %s327 = smul.addr %s326, 8
      %s328 = scalar_lea.vmem %s3, %s327
      %p329 = scmp.lt.s32.totalorder %s19, 1
      %s330 = scalar_select %p329, %s19, 1
      %s331 = smul.addr %s330, 8
      %s332 = scalar_lea.vmem %s6, %s331
      %p333 = scmp.lt.s32.totalorder %s19, 1
      %s334 = scalar_select %p333, %s19, 1
      %s335 = smul.addr %s334, 8
      %s336 = smul.addr %s335, 8
      %s337 = scalar_lea.vmem %s7, %s336
      %v338 = vld [vmem:[%s316] sm:$0xff]
      %v339 = vld [vmem:[%s320] sm:$0x7]
      %v340 = vld [vmem:[%s323] sm:$0x1]
      %v341 = vld [vmem:[%s328] sm:$0xff]
      %v342 = vld [vmem:[%s328 + $0x8] sm:$0xff]
      %v343 = vld [vmem:[%s328 + $0x10] sm:$0xff]
      %v344 = vld [vmem:[%s328 + $0x18] sm:$0xff]
      %v345 = vld [vmem:[%s328 + $0x20] sm:$0xff]
      %v346 = vld [vmem:[%s328 + $0x28] sm:$0xff]
      %v347 = vld [vmem:[%s328 + $0x30] sm:$0xff]
      %v348 = vld [vmem:[%s328 + $0x38] sm:$0xff]
      %v349 = vld [vmem:[%s4] sm:$0x1]
      %v350 = vld [vmem:[%s5] sm:$0x1]
      %v351 = vlaneseq
      %v352 = vand.u32 %v351, 127
      %353 = vset.pattern.permute.xlu0 0
      %354 = vperm.xlu0 %353, %v338
      %v355 = vpop.permute.xlu0 %354
      %vm356 = vcmp.eq.s32.totalorder %v352, %v355
      %v357 = vsel %vm356, 1, 0
      %v358 = vcvt.s32.f32 %v357
      %vm359 = vcmask 523264
      %v361 = vsel %vm359, %v358, 0
      %363 = vmatprep.subr.mxu0 0.0
      %364 = vmatpush1.msra.mxu0 %v341
      %365 = vmatprep.subr.mxu0 0.0
      %366 = vmatpush1.msra.mxu0 %v342
      %367 = vmatprep.subr.mxu0 0.0
      %368 = vmatpush1.msra.mxu0 %v343
      %369 = vmatprep.subr.mxu0 0.0
      %370 = vmatpush1.msra.mxu0 %v344
      %371 = vmatprep.subr.mxu0 0.0
      %372 = vmatpush1.msra.mxu0 %v345
      %373 = vmatprep.subr.mxu0 0.0
      %374 = vmatpush1.msra.mxu0 %v346
      %375 = vmatprep.subr.mxu0 0.0
      %376 = vmatpush1.msra.mxu0 %v347
      %377 = vmatprep.subr.mxu0 0.0
      %378 = vmatpush1.msra.mxu0 %v348
      %379 = vmatprep.subr.mxu0 0.0
      %380 = vmatpush1.msra.mxu0 0.0
      %381 = vmatprep.subr.mxu0 0.0
      %382 = vmatpush1.msra.mxu0 0.0
      %383 = vmatprep.subr.mxu0 0.0
      %384 = vmatpush1.msra.mxu0 0.0
      %385 = vmatprep.subr.mxu0 0.0
      %386 = vmatpush1.msra.mxu0 0.0
      %387 = vmatprep.subr.mxu0 0.0
      %388 = vmatpush1.msra.mxu0 0.0
      %389 = vmatprep.subr.mxu0 0.0
      %390 = vmatpush1.msra.mxu0 0.0
      %391 = vmatprep.subr.mxu0 0.0
      %392 = vmatpush1.msra.mxu0 0.0
      %393 = vmatprep.subr.mxu0 0.0
      %394 = vmatpush1.msra.mxu0 0.0
      %395 = vmatprep.subr.mxu0 0.0
      %396 = vmatpush1.msra.mxu0 0.0
      %397 = vmatprep.subr.mxu0 0.0
      %398 = vmatpush1.msra.mxu0 0.0
      %399 = vmatprep.subr.mxu0 0.0
      %400 = vmatpush1.msra.mxu0 0.0
      %401 = vmatprep.subr.mxu0 0.0
      %402 = vmatpush1.msra.mxu0 0.0
      %403 = vmatprep.subr.mxu0 0.0
      %404 = vmatpush1.msra.mxu0 0.0
      %405 = vmatprep.subr.mxu0 0.0
      %406 = vmatpush1.msra.mxu0 0.0
      %407 = vmatprep.subr.mxu0 0.0
      %408 = vmatpush1.msra.mxu0 0.0
      %409 = vmatprep.subr.mxu0 0.0
      %410 = vmatpush1.msra.mxu0 0.0
      %411 = vmatprep.subr.mxu0 0.0
      %412 = vmatpush1.msra.mxu0 0.0
      %413 = vmatprep.subr.mxu0 0.0
      %414 = vmatpush1.msra.mxu0 0.0
      %415 = vmatprep.subr.mxu0 0.0
      %416 = vmatpush1.msra.mxu0 0.0
      %417 = vmatprep.subr.mxu0 0.0
      %418 = vmatpush1.msra.mxu0 0.0
      %419 = vmatprep.subr.mxu0 0.0
      %420 = vmatpush1.msra.mxu0 0.0
      %421 = vmatprep.subr.mxu0 0.0
      %422 = vmatpush1.msra.mxu0 0.0
      %423 = vmatprep.subr.mxu0 0.0
      %424 = vmatpush1.msra.mxu0 0.0
      %425 = vmatprep.subr.mxu0 0.0
      %426 = vmatpush1.msra.mxu0 0.0
      %427 = vmatprep.mubr.f32.mxu0 0.0
      %428 = vmatmul.mubr.f32.gmra.mrb[0].mxu0 %v361
      %v429 = vpop.f32.mrb[0].mxu0
      %v430 = vadd.f32 0.0, %v429
      %v431 = vpop.f32.mrb[0].mxu0
      %432 = vdwg.mxu0
      %434 = vrot.lane.b32.xlu0 %v430, 112
      %v435 = vpop.permute.xlu0 %434
      %vm437 = vcmask 23552
      %438 = vst.msk [vmem:[%s332] sm:$0xff] %vm437, %v435
      %v439 = vsel %vm437, %v435, 0
      %vm441 = vcmask 1042432
      %v443 = vsel %vm441, %v339, 0
      %445 = vmatprep.subr.mxu0 0.0
      %446 = vmatpush1.msra.mxu0 %v443
      %447 = vmatprep.subr.mxu0 0.0
      %448 = vmatpush1.msra.mxu0 0.0
      %449 = vmatprep.subr.mxu0 0.0
      %450 = vmatpush1.msra.mxu0 0.0
      %451 = vmatprep.subr.mxu0 0.0
      %452 = vmatpush1.msra.mxu0 0.0
      %453 = vmatprep.subr.mxu0 0.0
      %454 = vmatpush1.msra.mxu0 0.0
      %455 = vmatprep.subr.mxu0 0.0
      %456 = vmatpush1.msra.mxu0 0.0
      %457 = vmatprep.subr.mxu0 0.0
      %458 = vmatpush1.msra.mxu0 0.0
      %459 = vmatprep.subr.mxu0 0.0
      %460 = vmatpush1.msra.mxu0 0.0
      %461 = vmatprep.subr.mxu0 0.0
      %462 = vmatpush1.msra.mxu0 0.0
      %463 = vmatprep.subr.mxu0 0.0
      %464 = vmatpush1.msra.mxu0 0.0
      %465 = vmatprep.subr.mxu0 0.0
      %466 = vmatpush1.msra.mxu0 0.0
      %467 = vmatprep.subr.mxu0 0.0
      %468 = vmatpush1.msra.mxu0 0.0
      %469 = vmatprep.subr.mxu0 0.0
      %470 = vmatpush1.msra.mxu0 0.0
      %471 = vmatprep.subr.mxu0 0.0
      %472 = vmatpush1.msra.mxu0 0.0
      %473 = vmatprep.subr.mxu0 0.0
      %474 = vmatpush1.msra.mxu0 0.0
      %475 = vmatprep.subr.mxu0 0.0
      %476 = vmatpush1.msra.mxu0 0.0
      %477 = vmatprep.subr.mxu0 0.0
      %478 = vmatpush1.msra.mxu0 0.0
      %479 = vmatprep.subr.mxu0 0.0
      %480 = vmatpush1.msra.mxu0 0.0
      %481 = vmatprep.subr.mxu0 0.0
      %482 = vmatpush1.msra.mxu0 0.0
      %483 = vmatprep.subr.mxu0 0.0
      %484 = vmatpush1.msra.mxu0 0.0
      %485 = vmatprep.subr.mxu0 0.0
      %486 = vmatpush1.msra.mxu0 0.0
      %487 = vmatprep.subr.mxu0 0.0
      %488 = vmatpush1.msra.mxu0 0.0
      %489 = vmatprep.subr.mxu0 0.0
      %490 = vmatpush1.msra.mxu0 0.0
      %491 = vmatprep.subr.mxu0 0.0
      %492 = vmatpush1.msra.mxu0 0.0
      %493 = vmatprep.subr.mxu0 0.0
      %494 = vmatpush1.msra.mxu0 0.0
      %495 = vmatprep.subr.mxu0 0.0
      %496 = vmatpush1.msra.mxu0 0.0
      %497 = vmatprep.subr.mxu0 0.0
      %498 = vmatpush1.msra.mxu0 0.0
      %499 = vmatprep.subr.mxu0 0.0
      %500 = vmatpush1.msra.mxu0 0.0
      %501 = vmatprep.subr.mxu0 0.0
      %502 = vmatpush1.msra.mxu0 0.0
      %503 = vmatprep.subr.mxu0 0.0
      %504 = vmatpush1.msra.mxu0 0.0
      %505 = vmatprep.subr.mxu0 0.0
      %506 = vmatpush1.msra.mxu0 0.0
      %507 = vmatprep.subr.mxu0 0.0
      %508 = vmatpush1.msra.mxu0 0.0
      %509 = vmatprep.mubr.f32.mxu0 0.0
      %510 = vmatmul.mubr.f32.gmra.mrb[0].mxu0 %v439
      %v511 = vpop.f32.mrb[0].mxu0
      %v512 = vadd.f32 0.0, %v511
      %v513 = vpop.f32.mrb[0].mxu0
      %514 = vdwg.mxu0
      %v515 = vmul.f32 %v430, %v430
      %517 = vrot.lane.b32.xlu0 %v515, 112
      %v518 = vpop.permute.xlu0 %517
      %v520 = vsel %vm437, %v518, 0.0
      %521 = vadd.xlane.f32.xlu0 %v520
      %v522 = vpop.xlane.xlu0 %521
      %v523 = vmul.f32 %v512, 2.0
      %v524 = vsub.f32 %v522, %v523
      %v526 = vlaneseq
      %v527 = vshrl.u32 %v526, 7
      %v528 = vsub.s32 0, %v527
      %v529 = vrot.slane %v340, %v528
      %v531 = vadd.f32 %v524, %v529
      %532 = vst.msk [vmem:[#allocation3] sm:$0xff] %vm359, %v531
      %v533 = vld [vmem:[#allocation3] sm:$0xff]
      %v534 = vsel %vm359, %v533, inf
      %535 = vmin.xlane.f32.xlu0 %v534
      %v536 = vpop.xlane.xlu0 %535
      %vm537 = vcmp.eq.f32.partialorder %v533, %v536
      %v538 = vsel %vm537, %v352, 64
      %v539 = vsel %vm359, %v538, 2147483647
      %v540 = vand.u32 %v539, 65535
      %v541 = vshra.s32 %v539, 16
      %v542 = vcvt.s32.f32 %v540
      %v543 = vcvt.s32.f32 %v541
      %544 = vmin.xlane.f32.xlu0 %v543
      %v545 = vpop.xlane.xlu0 %544
      %vm546 = vcmp.eq.f32.partialorder %v543, %v545
      %v547 = vsel %vm546, %v542, inf
      %548 = vmin.xlane.f32.xlu0 %v547
      %v549 = vpop.xlane.xlu0 %548
      %v550 = vcvt.f32.s32 %v549
      %v551 = vcvt.f32.s32 %v545
      %v552 = vshll.u32 %v551, 16
      %v553 = vadd.s32 %v552, %v550
      %vm554 = vcmp.eq.s32.totalorder %v352, %v553
      %v555 = vsel %vm554, 1, 0
      %v556 = vcvt.s32.f32 %v555
      %557 = vst.msk [vmem:[#allocation2] sm:$0xff] %vm359, %v556
      %v558 = vsel %vm554, 1e+30, %v533
      %559 = vst.msk [vmem:[#allocation3] sm:$0xff] %vm359, %v558
      %v560 = vld [vmem:[#allocation3] sm:$0xff]
      %v561 = vsel %vm359, %v560, inf
      %562 = vmin.xlane.f32.xlu0 %v561
      %v563 = vpop.xlane.xlu0 %562
      %vm564 = vcmp.eq.f32.partialorder %v560, %v563
      %v565 = vsel %vm564, %v352, 64
      %v566 = vsel %vm359, %v565, 2147483647
      %v567 = vand.u32 %v566, 65535
      %v568 = vshra.s32 %v566, 16
      %v569 = vcvt.s32.f32 %v567
      %v570 = vcvt.s32.f32 %v568
      %571 = vmin.xlane.f32.xlu0 %v570
      %v572 = vpop.xlane.xlu0 %571
      %vm573 = vcmp.eq.f32.partialorder %v570, %v572
      %v574 = vsel %vm573, %v569, inf
      %575 = vmin.xlane.f32.xlu0 %v574
      %v576 = vpop.xlane.xlu0 %575
      %v577 = vcvt.f32.s32 %v576
      %v578 = vcvt.f32.s32 %v572
      %v579 = vshll.u32 %v578, 16
      %v580 = vadd.s32 %v579, %v577
      %vm581 = vcmp.eq.s32.totalorder %v352, %v580
      %v582 = vsel %vm581, 1, 0
      %v583 = vcvt.s32.f32 %v582
      %584 = vst.msk [vmem:[#allocation2 + $0x8] sm:$0xff] %vm359, %v583
      %v585 = vsel %vm581, 1e+30, %v560
      %586 = vst.msk [vmem:[#allocation3] sm:$0xff] %vm359, %v585
      %v587 = vld [vmem:[#allocation3] sm:$0xff]
      %v588 = vsel %vm359, %v587, inf
      %589 = vmin.xlane.f32.xlu0 %v588
      %v590 = vpop.xlane.xlu0 %589
      %vm591 = vcmp.eq.f32.partialorder %v587, %v590
      %v592 = vsel %vm591, %v352, 64
      %v593 = vsel %vm359, %v592, 2147483647
      %v594 = vand.u32 %v593, 65535
      %v595 = vshra.s32 %v593, 16
      %v596 = vcvt.s32.f32 %v594
      %v597 = vcvt.s32.f32 %v595
      %598 = vmin.xlane.f32.xlu0 %v597
      %v599 = vpop.xlane.xlu0 %598
      %vm600 = vcmp.eq.f32.partialorder %v597, %v599
      %v601 = vsel %vm600, %v596, inf
      %602 = vmin.xlane.f32.xlu0 %v601
      %v603 = vpop.xlane.xlu0 %602
      %v604 = vcvt.f32.s32 %v603
      %v605 = vcvt.f32.s32 %v599
      %v606 = vshll.u32 %v605, 16
      %v607 = vadd.s32 %v606, %v604
      %vm608 = vcmp.eq.s32.totalorder %v352, %v607
      %v609 = vsel %vm608, 1, 0
      %v610 = vcvt.s32.f32 %v609
      %611 = vst.msk [vmem:[#allocation2 + $0x10] sm:$0xff] %vm359, %v610
      %v612 = vsel %vm608, 1e+30, %v587
      %613 = vst.msk [vmem:[#allocation3] sm:$0xff] %vm359, %v612
      %v614 = vld [vmem:[#allocation3] sm:$0xff]
      %v615 = vsel %vm359, %v614, inf
      %616 = vmin.xlane.f32.xlu0 %v615
      %v617 = vpop.xlane.xlu0 %616
      %vm618 = vcmp.eq.f32.partialorder %v614, %v617
      %v619 = vsel %vm618, %v352, 64
      %v620 = vsel %vm359, %v619, 2147483647
      %v621 = vand.u32 %v620, 65535
      %v622 = vshra.s32 %v620, 16
      %v623 = vcvt.s32.f32 %v621
      %v624 = vcvt.s32.f32 %v622
      %625 = vmin.xlane.f32.xlu0 %v624
      %v626 = vpop.xlane.xlu0 %625
      %vm627 = vcmp.eq.f32.partialorder %v624, %v626
      %v628 = vsel %vm627, %v623, inf
      %629 = vmin.xlane.f32.xlu0 %v628
      %v630 = vpop.xlane.xlu0 %629
      %v631 = vcvt.f32.s32 %v630
      %v632 = vcvt.f32.s32 %v626
      %v633 = vshll.u32 %v632, 16
      %v634 = vadd.s32 %v633, %v631
      %vm635 = vcmp.eq.s32.totalorder %v352, %v634
      %v636 = vsel %vm635, 1, 0
      %v637 = vcvt.s32.f32 %v636
      %638 = vst.msk [vmem:[#allocation2 + $0x18] sm:$0xff] %vm359, %v637
      %v639 = vsel %vm635, 1e+30, %v614
      %640 = vst.msk [vmem:[#allocation3] sm:$0xff] %vm359, %v639
      %v641 = vld [vmem:[#allocation3] sm:$0xff]
      %v642 = vsel %vm359, %v641, inf
      %643 = vmin.xlane.f32.xlu0 %v642
      %v644 = vpop.xlane.xlu0 %643
      %vm645 = vcmp.eq.f32.partialorder %v641, %v644
      %v646 = vsel %vm645, %v352, 64
      %v647 = vsel %vm359, %v646, 2147483647
      %v648 = vand.u32 %v647, 65535
      %v649 = vshra.s32 %v647, 16
      %v650 = vcvt.s32.f32 %v648
      %v651 = vcvt.s32.f32 %v649
      %652 = vmin.xlane.f32.xlu0 %v651
      %v653 = vpop.xlane.xlu0 %652
      %vm654 = vcmp.eq.f32.partialorder %v651, %v653
      %v655 = vsel %vm654, %v650, inf
      %656 = vmin.xlane.f32.xlu0 %v655
      %v657 = vpop.xlane.xlu0 %656
      %v658 = vcvt.f32.s32 %v657
      %v659 = vcvt.f32.s32 %v653
      %v660 = vshll.u32 %v659, 16
      %v661 = vadd.s32 %v660, %v658
      %vm662 = vcmp.eq.s32.totalorder %v352, %v661
      %v663 = vsel %vm662, 1, 0
      %v664 = vcvt.s32.f32 %v663
      %665 = vst.msk [vmem:[#allocation2 + $0x20] sm:$0xff] %vm359, %v664
      %v666 = vsel %vm662, 1e+30, %v641
      %667 = vst.msk [vmem:[#allocation3] sm:$0xff] %vm359, %v666
      %v668 = vld [vmem:[#allocation3] sm:$0xff]
      %v669 = vsel %vm359, %v668, inf
      %670 = vmin.xlane.f32.xlu0 %v669
      %v671 = vpop.xlane.xlu0 %670
      %vm672 = vcmp.eq.f32.partialorder %v668, %v671
      %v673 = vsel %vm672, %v352, 64
      %v674 = vsel %vm359, %v673, 2147483647
      %v675 = vand.u32 %v674, 65535
      %v676 = vshra.s32 %v674, 16
      %v677 = vcvt.s32.f32 %v675
      %v678 = vcvt.s32.f32 %v676
      %679 = vmin.xlane.f32.xlu0 %v678
      %v680 = vpop.xlane.xlu0 %679
      %vm681 = vcmp.eq.f32.partialorder %v678, %v680
      %v682 = vsel %vm681, %v677, inf
      %683 = vmin.xlane.f32.xlu0 %v682
      %v684 = vpop.xlane.xlu0 %683
      %v685 = vcvt.f32.s32 %v684
      %v686 = vcvt.f32.s32 %v680
      %v687 = vshll.u32 %v686, 16
      %v688 = vadd.s32 %v687, %v685
      %vm689 = vcmp.eq.s32.totalorder %v352, %v688
      %v690 = vsel %vm689, 1, 0
      %v691 = vcvt.s32.f32 %v690
      %692 = vst.msk [vmem:[#allocation2 + $0x28] sm:$0xff] %vm359, %v691
      %v693 = vsel %vm689, 1e+30, %v668
      %694 = vst.msk [vmem:[#allocation3] sm:$0xff] %vm359, %v693
      %v695 = vld [vmem:[#allocation3] sm:$0xff]
      %v696 = vsel %vm359, %v695, inf
      %697 = vmin.xlane.f32.xlu0 %v696
      %v698 = vpop.xlane.xlu0 %697
      %vm699 = vcmp.eq.f32.partialorder %v695, %v698
      %v700 = vsel %vm699, %v352, 64
      %v701 = vsel %vm359, %v700, 2147483647
      %v702 = vand.u32 %v701, 65535
      %v703 = vshra.s32 %v701, 16
      %v704 = vcvt.s32.f32 %v702
      %v705 = vcvt.s32.f32 %v703
      %706 = vmin.xlane.f32.xlu0 %v705
      %v707 = vpop.xlane.xlu0 %706
      %vm708 = vcmp.eq.f32.partialorder %v705, %v707
      %v709 = vsel %vm708, %v704, inf
      %710 = vmin.xlane.f32.xlu0 %v709
      %v711 = vpop.xlane.xlu0 %710
      %v712 = vcvt.f32.s32 %v711
      %v713 = vcvt.f32.s32 %v707
      %v714 = vshll.u32 %v713, 16
      %v715 = vadd.s32 %v714, %v712
      %vm716 = vcmp.eq.s32.totalorder %v352, %v715
      %v717 = vsel %vm716, 1, 0
      %v718 = vcvt.s32.f32 %v717
      %719 = vst.msk [vmem:[#allocation2 + $0x30] sm:$0xff] %vm359, %v718
      %v720 = vsel %vm716, 1e+30, %v695
      %721 = vst.msk [vmem:[#allocation3] sm:$0xff] %vm359, %v720
      %v722 = vld [vmem:[#allocation3] sm:$0xff]
      %v723 = vsel %vm359, %v722, inf
      %724 = vmin.xlane.f32.xlu0 %v723
      %v725 = vpop.xlane.xlu0 %724
      %vm726 = vcmp.eq.f32.partialorder %v722, %v725
      %v727 = vsel %vm726, %v352, 64
      %v728 = vsel %vm359, %v727, 2147483647
      %v729 = vand.u32 %v728, 65535
      %v730 = vshra.s32 %v728, 16
      %v731 = vcvt.s32.f32 %v729
      %v732 = vcvt.s32.f32 %v730
      %733 = vmin.xlane.f32.xlu0 %v732
      %v734 = vpop.xlane.xlu0 %733
      %vm735 = vcmp.eq.f32.partialorder %v732, %v734
      %v736 = vsel %vm735, %v731, inf
      %737 = vmin.xlane.f32.xlu0 %v736
      %v738 = vpop.xlane.xlu0 %737
      %v739 = vcvt.f32.s32 %v738
      %v740 = vcvt.f32.s32 %v734
      %v741 = vshll.u32 %v740, 16
      %v742 = vadd.s32 %v741, %v739
      %vm743 = vcmp.eq.s32.totalorder %v352, %v742
      %v744 = vsel %vm743, 1, 0
      %v745 = vcvt.s32.f32 %v744
      %746 = vst.msk [vmem:[#allocation2 + $0x38] sm:$0xff] %vm359, %v745
      %v747 = vsel %vm743, 1e+30, %v722
      %748 = vst.msk [vmem:[#allocation3] sm:$0xff] %vm359, %v747
      %v749 = vld [vmem:[#allocation2] sm:$0xff]
      %v750 = vld [vmem:[#allocation2 + $0x8] sm:$0xff]
      %v751 = vld [vmem:[#allocation2 + $0x10] sm:$0xff]
      %v752 = vld [vmem:[#allocation2 + $0x18] sm:$0xff]
      %v753 = vld [vmem:[#allocation2 + $0x20] sm:$0xff]
      %v754 = vld [vmem:[#allocation2 + $0x28] sm:$0xff]
      %v755 = vld [vmem:[#allocation2 + $0x30] sm:$0xff]
      %v756 = vld [vmem:[#allocation2 + $0x38] sm:$0xff]
      %v758 = vsel %vm359, %v749, 0
      %v761 = vsel %vm359, %v750, 0
      %v764 = vsel %vm359, %v751, 0
      %v767 = vsel %vm359, %v752, 0
      %v770 = vsel %vm359, %v753, 0
      %v773 = vsel %vm359, %v754, 0
      %v776 = vsel %vm359, %v755, 0
      %v779 = vsel %vm359, %v756, 0
      %781 = vmatprep.subr.mxu0 0.0
      %782 = vmatpush1.msra.mxu0 %v341
      %783 = vmatprep.subr.mxu0 0.0
      %784 = vmatpush1.msra.mxu0 %v342
      %785 = vmatprep.subr.mxu0 0.0
      %786 = vmatpush1.msra.mxu0 %v343
      %787 = vmatprep.subr.mxu0 0.0
      %788 = vmatpush1.msra.mxu0 %v344
      %789 = vmatprep.subr.mxu0 0.0
      %790 = vmatpush1.msra.mxu0 %v345
      %791 = vmatprep.subr.mxu0 0.0
      %792 = vmatpush1.msra.mxu0 %v346
      %793 = vmatprep.subr.mxu0 0.0
      %794 = vmatpush1.msra.mxu0 %v347
      %795 = vmatprep.subr.mxu0 0.0
      %796 = vmatpush1.msra.mxu0 %v348
      %797 = vmatprep.subr.mxu0 0.0
      %798 = vmatpush1.msra.mxu0 0.0
      %799 = vmatprep.subr.mxu0 0.0
      %800 = vmatpush1.msra.mxu0 0.0
      %801 = vmatprep.subr.mxu0 0.0
      %802 = vmatpush1.msra.mxu0 0.0
      %803 = vmatprep.subr.mxu0 0.0
      %804 = vmatpush1.msra.mxu0 0.0
      %805 = vmatprep.subr.mxu0 0.0
      %806 = vmatpush1.msra.mxu0 0.0
      %807 = vmatprep.subr.mxu0 0.0
      %808 = vmatpush1.msra.mxu0 0.0
      %809 = vmatprep.subr.mxu0 0.0
      %810 = vmatpush1.msra.mxu0 0.0
      %811 = vmatprep.subr.mxu0 0.0
      %812 = vmatpush1.msra.mxu0 0.0
      %813 = vmatprep.subr.mxu0 0.0
      %814 = vmatpush1.msra.mxu0 0.0
      %815 = vmatprep.subr.mxu0 0.0
      %816 = vmatpush1.msra.mxu0 0.0
      %817 = vmatprep.subr.mxu0 0.0
      %818 = vmatpush1.msra.mxu0 0.0
      %819 = vmatprep.subr.mxu0 0.0
      %820 = vmatpush1.msra.mxu0 0.0
      %821 = vmatprep.subr.mxu0 0.0
      %822 = vmatpush1.msra.mxu0 0.0
      %823 = vmatprep.subr.mxu0 0.0
      %824 = vmatpush1.msra.mxu0 0.0
      %825 = vmatprep.subr.mxu0 0.0
      %826 = vmatpush1.msra.mxu0 0.0
      %827 = vmatprep.subr.mxu0 0.0
      %828 = vmatpush1.msra.mxu0 0.0
      %829 = vmatprep.subr.mxu0 0.0
      %830 = vmatpush1.msra.mxu0 0.0
      %831 = vmatprep.subr.mxu0 0.0
      %832 = vmatpush1.msra.mxu0 0.0
      %833 = vmatprep.subr.mxu0 0.0
      %834 = vmatpush1.msra.mxu0 0.0
      %835 = vmatprep.subr.mxu0 0.0
      %836 = vmatpush1.msra.mxu0 0.0
      %837 = vmatprep.subr.mxu0 0.0
      %838 = vmatpush1.msra.mxu0 0.0
      %839 = vmatprep.subr.mxu0 0.0
      %840 = vmatpush1.msra.mxu0 0.0
      %841 = vmatprep.subr.mxu0 0.0
      %842 = vmatpush1.msra.mxu0 0.0
      %843 = vmatprep.subr.mxu0 0.0
      %844 = vmatpush1.msra.mxu0 0.0
      %845 = vmatprep.mubr.f32.mxu0 0.0
      %846 = vmatmul.mubr.f32.gmra.mrb[0].mxu0 %v758
      %v847 = vpop.f32.mrb[0].mxu0
      %v848 = vadd.f32 0.0, %v847
      %v849 = vpop.f32.mrb[0].mxu0
      %850 = vmatprep.mubr.f32.mxu0 0.0
      %851 = vmatmul.mubr.f32.gmra.mrb[0].mxu0 %v761
      %v852 = vpop.f32.mrb[0].mxu0
      %v853 = vadd.f32 0.0, %v852
      %v854 = vpop.f32.mrb[0].mxu0
      %855 = vmatprep.mubr.f32.mxu0 0.0
      %856 = vmatmul.mubr.f32.gmra.mrb[0].mxu0 %v764
      %v857 = vpop.f32.mrb[0].mxu0
      %v858 = vadd.f32 0.0, %v857
      %v859 = vpop.f32.mrb[0].mxu0
      %860 = vmatprep.mubr.f32.mxu0 0.0
      %861 = vmatmul.mubr.f32.gmra.mrb[0].mxu0 %v767
      %v862 = vpop.f32.mrb[0].mxu0
      %v863 = vadd.f32 0.0, %v862
      %v864 = vpop.f32.mrb[0].mxu0
      %865 = vmatprep.mubr.f32.mxu0 0.0
      %866 = vmatmul.mubr.f32.gmra.mrb[0].mxu0 %v770
      %v867 = vpop.f32.mrb[0].mxu0
      %v868 = vadd.f32 0.0, %v867
      %v869 = vpop.f32.mrb[0].mxu0
      %870 = vmatprep.mubr.f32.mxu0 0.0
      %871 = vmatmul.mubr.f32.gmra.mrb[0].mxu0 %v773
      %v872 = vpop.f32.mrb[0].mxu0
      %v873 = vadd.f32 0.0, %v872
      %v874 = vpop.f32.mrb[0].mxu0
      %875 = vmatprep.mubr.f32.mxu0 0.0
      %876 = vmatmul.mubr.f32.gmra.mrb[0].mxu0 %v776
      %v877 = vpop.f32.mrb[0].mxu0
      %v878 = vadd.f32 0.0, %v877
      %v879 = vpop.f32.mrb[0].mxu0
      %880 = vmatprep.mubr.f32.mxu0 0.0
      %881 = vmatmul.mubr.f32.gmra.mrb[0].mxu0 %v779
      %v882 = vpop.f32.mrb[0].mxu0
      %v883 = vadd.f32 0.0, %v882
      %v884 = vpop.f32.mrb[0].mxu0
      %885 = vdwg.mxu0
      %vm886 = vcmask 154624
      %v887 = vsel %vm886, %v848, 0.0
      %v888 = vsel %vm886, %v853, 0.0
      %v889 = vadd.f32 %v887, %v888
      %v890 = vsel %vm886, %v858, 0.0
      %v891 = vadd.f32 %v889, %v890
      %v892 = vsel %vm886, %v863, 0.0
      %v893 = vadd.f32 %v891, %v892
      %v894 = vsel %vm886, %v868, 0.0
      %v895 = vadd.f32 %v893, %v894
      %v896 = vsel %vm886, %v873, 0.0
      %v897 = vadd.f32 %v895, %v896
      %v898 = vsel %vm886, %v878, 0.0
      %v899 = vadd.f32 %v897, %v898
      %v900 = vsel %vm886, %v883, 0.0
      %v901 = vadd.f32 %v899, %v900
      %v902 = vmul.f32 %v901, 0.125
      %v903 = vsub.f32 %v848, %v902
      %v904 = vsub.f32 %v853, %v902
      %v905 = vsub.f32 %v858, %v902
      %v906 = vsub.f32 %v863, %v902
      %v907 = vsub.f32 %v868, %v902
      %v908 = vsub.f32 %v873, %v902
      %v909 = vsub.f32 %v878, %v902
      %v910 = vsub.f32 %v883, %v902
      %v911 = vsel %vm886, %v903, 0.0
      %v912 = vsel %vm886, %v904, 0.0
      %v913 = vadd.f32 %v911, %v912
      %v914 = vsel %vm886, %v905, 0.0
      %v915 = vadd.f32 %v913, %v914
      %v916 = vsel %vm886, %v906, 0.0
      %v917 = vadd.f32 %v915, %v916
      %v918 = vsel %vm886, %v907, 0.0
      %v919 = vadd.f32 %v917, %v918
      %v920 = vsel %vm886, %v908, 0.0
      %v921 = vadd.f32 %v919, %v920
      %v922 = vsel %vm886, %v909, 0.0
      %v923 = vadd.f32 %v921, %v922
      %v924 = vsel %vm886, %v910, 0.0
      %v925 = vadd.f32 %v923, %v924
      %926 = vadd.xlane.f32.xlu0 %v925
      %v927 = vpop.xlane.xlu0 %926
      %v928 = vrot.slane %v927, 4
      %v929 = vadd.f32 %v927, %v928
      %v930 = vrot.slane %v929, 2
      %v931 = vadd.f32 %v929, %v930
      %v932 = vrot.slane %v931, 1
      %v933 = vadd.f32 %v931, %v932
      %s934 = vtos %v933
      %v935 = vstv %s934
      %v936 = vmul.f32 %v935, 0.0008223684
      %v937 = vsub.f32 %v903, %v936
      %v938 = vsub.f32 %v904, %v936
      %v939 = vsub.f32 %v905, %v936
      %v940 = vsub.f32 %v906, %v936
      %v941 = vsub.f32 %v907, %v936
      %v942 = vsub.f32 %v908, %v936
      %v943 = vsub.f32 %v909, %v936
      %v944 = vsub.f32 %v910, %v936
      %v945 = vmul.f32 %v937, %v937
      %v946 = vmul.f32 %v938, %v938
      %v947 = vmul.f32 %v939, %v939
      %v948 = vmul.f32 %v940, %v940
      %v949 = vmul.f32 %v941, %v941
      %v950 = vmul.f32 %v942, %v942
      %v951 = vmul.f32 %v943, %v943
      %v952 = vmul.f32 %v944, %v944
      %v953 = vsel %vm886, %v945, 0.0
      %v954 = vsel %vm886, %v946, 0.0
      %v955 = vadd.f32 %v953, %v954
      %v956 = vsel %vm886, %v947, 0.0
      %v957 = vadd.f32 %v955, %v956
      %v958 = vsel %vm886, %v948, 0.0
      %v959 = vadd.f32 %v957, %v958
      %v960 = vsel %vm886, %v949, 0.0
      %v961 = vadd.f32 %v959, %v960
      %v962 = vsel %vm886, %v950, 0.0
      %v963 = vadd.f32 %v961, %v962
      %v964 = vsel %vm886, %v951, 0.0
      %v965 = vadd.f32 %v963, %v964
      %v966 = vsel %vm886, %v952, 0.0
      %v967 = vadd.f32 %v965, %v966
      %968 = vadd.xlane.f32.xlu0 %v967
      %v969 = vpop.xlane.xlu0 %968
      %v970 = vrot.slane %v969, 4
      %v971 = vadd.f32 %v969, %v970
      %v972 = vrot.slane %v971, 2
      %v973 = vadd.f32 %v971, %v972
      %v974 = vrot.slane %v973, 1
      %v975 = vadd.f32 %v973, %v974
      %s976 = vtos %v975
      %v977 = vstv %s976
      %v978 = vmul.f32 %v977, 0.00082304527
      %v979 = vrsqrt.pop %v978
      %v980 = vmul.f32 %v978, %v979
      %vm981 = vcmp.eq.f32.partialorder %v978, inf
      %v982 = vsel %vm981, %v978, %v980
      %vm983 = vcmp.eq.f32.partialorder %v978, 0.0
      %v984 = vand.u32 %v978, 2147483648
      %v985 = vsel %vm983, %v984, %v982
      %v986 = vadd.f32 %v985, 1e-05
      %v987 = vrcp.pop %v986
      %v988 = vmul.f32 1.0, %v987
      %v989 = vmul.f32 %v903, %v988
      %v990 = vmul.f32 %v904, %v988
      %v991 = vmul.f32 %v905, %v988
      %v992 = vmul.f32 %v906, %v988
      %v993 = vmul.f32 %v907, %v988
      %v994 = vmul.f32 %v908, %v988
      %v995 = vmul.f32 %v909, %v988
      %v996 = vmul.f32 %v910, %v988
      %v998 = vlaneseq
      %v999 = vshrl.u32 %v998, 7
      %v1000 = vsub.s32 0, %v999
      %v1001 = vrot.slane %v349, %v1000
      %v1003 = vmul.f32 %v1001, %v989
      %v1004 = vmul.f32 %v1001, %v990
      %v1005 = vmul.f32 %v1001, %v991
      %v1006 = vmul.f32 %v1001, %v992
      %v1007 = vmul.f32 %v1001, %v993
      %v1008 = vmul.f32 %v1001, %v994
      %v1009 = vmul.f32 %v1001, %v995
      %v1010 = vmul.f32 %v1001, %v996
      %v1012 = vlaneseq
      %v1013 = vshrl.u32 %v1012, 7
      %v1014 = vsub.s32 0, %v1013
      %v1015 = vrot.slane %v350, %v1014
      %v1017 = vadd.f32 %v1003, %v1015
      %v1018 = vadd.f32 %v1004, %v1015
      %v1019 = vadd.f32 %v1005, %v1015
      %v1020 = vadd.f32 %v1006, %v1015
      %v1021 = vadd.f32 %v1007, %v1015
      %v1022 = vadd.f32 %v1008, %v1015
      %v1023 = vadd.f32 %v1009, %v1015
      %v1024 = vadd.f32 %v1010, %v1015
      %1025 = vrot.lane.b32.xlu0 %v430, 19
      %v1026 = vpop.permute.xlu0 %1025
      %v1028 = vsel %vm886, %v1017, %v1026
      %v1029 = vsel %vm886, %v1018, %v1026
      %v1030 = vsel %vm886, %v1019, %v1026
      %v1031 = vsel %vm886, %v1020, %v1026
      %v1032 = vsel %vm886, %v1021, %v1026
      %v1033 = vsel %vm886, %v1022, %v1026
      %v1034 = vsel %vm886, %v1023, %v1026
      %v1035 = vsel %vm886, %v1024, %v1026
      %vm1036 = vcmask 285696
      %1037 = vst.msk [vmem:[%s337] sm:$0xff] %vm1036, %v1028
      %1038 = vst.msk [vmem:[%s337 + $0x8] sm:$0xff] %vm1036, %v1029
      %1039 = vst.msk [vmem:[%s337 + $0x10] sm:$0xff] %vm1036, %v1030
      %1040 = vst.msk [vmem:[%s337 + $0x18] sm:$0xff] %vm1036, %v1031
      %1041 = vst.msk [vmem:[%s337 + $0x20] sm:$0xff] %vm1036, %v1032
      %1042 = vst.msk [vmem:[%s337 + $0x28] sm:$0xff] %vm1036, %v1033
      %1043 = vst.msk [vmem:[%s337 + $0x30] sm:$0xff] %vm1036, %v1034
      %1044 = vst.msk [vmem:[%s337 + $0x38] sm:$0xff] %vm1036, %v1035
      %p1045 = scmp.lt.s32.totalorder %s19, 1
      %s1046 = scalar_select %p1045, %s19, 1
      %s1047 = smul.addr %s1046, 8
      %s1048 = scalar_lea.vmem %s6, %s1047
      %p1049 = scmp.lt.s32.totalorder %s19, 1
      %s1050 = scalar_select %p1049, %s19, 1
      %s1051 = smul.addr %s1050, 8
      %s1052 = smul.addr %s1051, 8
      %s1053 = scalar_lea.vmem %s7, %s1052
      // Predicated region
      $region45: #{run.1} parent=43 // pred_check
        %p1054 = pneg %p183
      $region46: #{run.1} parent=43 // pred_check_branch
        %1056 = sbr.rel (%p1054) target = $region48
      $region47: #{run.1} parent=43 // pred_region
        _
      $region48: #{run.1} parent=43 // pred_fallthru
        _
      // Predicated region
      $region49: #{run.1} parent=43 // pred_check
        %p1057 = pneg %p209
      $region50: #{run.1} parent=43 // pred_check_branch
        %1059 = sbr.rel (%p1057) target = $region52
      $region51: #{run.1} parent=43 // pred_region
        _
      $region52: #{run.1} parent=43 // pred_fallthru
        _
    $region44: #{run.1} parent=5 // pred_fallthru
      _
    %p1060 = scmp.le.s32.totalorder 2, %s14
    // Predicated region
    $region53: #{run.1} parent=5 // pred_check
      %p1061 = pneg %p1060
    $region54: #{run.1} parent=5 // pred_check_branch
      %1063 = sbr.rel (%p1061) target = $region56
    $region55: #{run.1} parent=5 // pred_region
      %s1064 = ssub.s32 %s14, 2
      // Predicated region
      $region57: #{run.1} parent=55 // pred_check
        %p1065 = pneg %p189
      $region58: #{run.1} parent=55 // pred_check_branch
        %1067 = sbr.rel (%p1065) target = $region60
      $region59: #{run.1} parent=55 // pred_region
        %p1068 = scmp.lt.s32.totalorder %s20, 1
        %s1069 = scalar_select %p1068, %s20, 1
        %s1070 = smul.addr %s1069, 8
        %s1071 = scalar_lea.vmem %s6, %s1070
      $region60: #{run.1} parent=55 // pred_fallthru
        _
      // Predicated region
      $region61: #{run.1} parent=55 // pred_check
        %p1072 = pneg %p215
      $region62: #{run.1} parent=55 // pred_check_branch
        %1074 = sbr.rel (%p1072) target = $region64
      $region63: #{run.1} parent=55 // pred_region
        %p1075 = scmp.lt.s32.totalorder %s20, 1
        %s1076 = scalar_select %p1075, %s20, 1
        %s1077 = smul.addr %s1076, 8
        %s1078 = smul.addr %s1077, 8
        %s1079 = scalar_lea.vmem %s7, %s1078
      $region64: #{run.1} parent=55 // pred_fallthru
        _
    $region56: #{run.1} parent=5 // pred_fallthru
      _
  $region6: #{run.1} parent=0 // loop_footer
    %s18 = sadd.s32 1, %s14
  $region7: #{run.1} parent=0 // loop_footer_branch
    %13 = sbr.rel target = $region3
  $region8: #{run.1} parent=0 // loop_exit
    _

</llo_original>
